<compile_context>
chip_gen: v7x
topology: tpu7x:2x2x1
jax: 0.10.0
libtpu: 0.0.40
codegen_flags: <defaults>
</compile_context>

<pallas_src>
import math

import jax
import jax.numpy as jnp
from jax import lax
from jax.experimental import pallas as pl
from jax.experimental.pallas import tpu as pltpu

EPSILON = 1e-7
SIGMA_BOOST = 2.0
NEG_INF = -1e30


# --------------------------------------------------------------------------------------
# Pallas kernels
# --------------------------------------------------------------------------------------
def _attn_kernel(x_ref, wq_ref, wk_ref, wv_ref, rows_ref, cols_ref,
                 mu_ref, sig_ref, dup_ref, o_ref):
    """Per batch element: entry weights + fused-head sparse attention.

    x_ref   : (1, T, E)   bf16
    wq/wk/wv: (E, H*E)    bf16 (scale folded into wq/wk)
    rows/cols: (1, VS, 1) int32   sparse COO (query, key) indices
    mu/sig  : (1, 2, K)   f32     transformed gaussian means / sigmas
    dup_ref : (1, VS, 1)  f32     1.0 where the index tuple is a duplicate
    o_ref   : (1, H*E, T) f32     output, already in the reference's scrambled layout
    """
    t = x_ref.shape[1]
    e = x_ref.shape[2]
    he = wq_ref.shape[1]
    h = he // e

    # ---- sparse entry weights: gaussian densities -> dedup -> normalize -> sum over K
    rows = rows_ref[0]                                   # (VS, 1) int32
    cols = cols_ref[0]                                   # (VS, 1) int32
    dup = dup_ref[0]                                     # (VS, 1) f32
    mu = mu_ref[0]                                       # (2, K)
    sig = sig_ref[0]                                     # (2, K)
    vs = rows.shape[0]

    p0 = rows.astype(jnp.float32)
    p1 = cols.astype(jnp.float32)
    m0, m1 = mu[0:1, :], mu[1:2, :]
    s0, s1 = sig[0:1, :], sig[1:2, :]
    quad = (p0 - m0) ** 2 / (s0 + EPSILON) + (p1 - m1) ** 2 / (s1 + EPSILON)   # (VS, K)
    props = jnp.exp(-0.5 * quad)
    props = props * (1.0 - dup)                                                # zero dups
    props = props / (jnp.sum(props, axis=0, keepdims=True) + EPSILON)          # per-gaussian
    w = jnp.sum(props, axis=1, keepdims=True)                                  # (VS, 1)

    # ---- fused-head QKV projection (bf16 operands, f32 accumulation on the MXU)
    x = x_ref[0]                                                               # (T, E) bf16
    q = jnp.dot(x, wq_ref[...], preferred_element_type=jnp.float32).astype(jnp.bfloat16)
    k = jnp.dot(x, wk_ref[...], preferred_element_type=jnp.float32).astype(jnp.bfloat16)
    v = jnp.dot(x, wv_ref[...], preferred_element_type=jnp.float32).astype(jnp.bfloat16)

    # ---- one-hot row/col gather matrices, built once for all heads
    iota = lax.broadcasted_iota(jnp.int32, (vs, t), 1)
    rmask = rows == iota                                                       # (VS, T)
    cmask = cols == iota
    r_f = rmask.astype(jnp.float32)
    r_bf = r_f.astype(jnp.bfloat16)
    c_bf = cmask.astype(jnp.float32).astype(jnp.bfloat16)

    sq = jnp.dot(r_bf, q, preferred_element_type=jnp.float32)                  # (VS, H*E)
    sk = jnp.dot(c_bf, k, preferred_element_type=jnp.float32)
    sv = jnp.dot(c_bf, v, preferred_element_type=jnp.float32)

    # ---- per-head q.k dots via a block-diagonal ones matrix (MXU, not an XLU reduce)
    f_iota = lax.broadcasted_iota(jnp.int32, (he, h), 0)
    h_iota = lax.broadcasted_iota(jnp.int32, (he, h), 1)
    bd = ((f_iota >= h_iota * e) & (f_iota < (h_iota + 1) * e)).astype(jnp.float32)
    dot_h = jnp.dot(sq * sk, bd, preferred_element_type=jnp.float32)           # (VS, H)
    wd = w * dot_h                                                             # (VS, H)

    # ---- sparse row-wise log-softmax, shared across heads
    # exact per-row max needs one (VS,T) pass per head; everything else is MXU work.
    rowmax_cols = []
    for hh in range(h):
        vals_h = jnp.where(rmask, wd[:, hh:hh + 1], NEG_INF)                   # (VS, T)
        rowmax_cols.append(jnp.max(vals_h, axis=0, keepdims=True))             # (1, T)
    rowmax = jnp.concatenate(rowmax_cols, axis=0)                              # (H, T)

    rm_e = lax.dot_general(r_f, rowmax, (((1,), (1,)), ((), ())),
                           preferred_element_type=jnp.float32)                 # (VS, H)
    expp = jnp.exp(wd - rm_e)                                                  # <= 1
    sums = lax.dot_general(expp, r_f, (((0,), (0,)), ((), ())),
                           preferred_element_type=jnp.float32)                 # (H, T)
    # sanitize rows with no sparse entries before the MXU gather (avoids 0 * inf)
    lse = jnp.where(sums > 0.0, rowmax + jnp.log(sums), 0.0)                   # (H, T)
    lse_e = lax.dot_general(r_f, lse, (((1,), (1,)), ((), ())),
                            preferred_element_type=jnp.float32)                # (VS, H)
    logp = wd - lse_e                                                          # log-probs
    # (reference quirk kept: values are aggregated with log-probabilities, no exp)

    # ---- sparse matrix @ values, emitted directly in the reference's (H*E, T) layout
    logp_full = lax.dot_general(logp, bd, (((1,), (1,)), ((), ())),
                                preferred_element_type=jnp.float32)            # (VS, H*E)
    m_bf = (logp_full * sv).astype(jnp.bfloat16)
    out_t = lax.dot_general(m_bf, r_bf, (((0,), (0,)), ((), ())),
                            preferred_element_type=jnp.float32)                # (H*E, T)
    o_ref[0] = out_t


def _unify_kernel(x_ref, w_ref, b_ref, o_ref):
    xb = x_ref[...].astype(jnp.bfloat16)
    o_ref[...] = (jnp.dot(xb, w_ref[...], preferred_element_type=jnp.float32)
                  + b_ref[...])


# --------------------------------------------------------------------------------------
# pallas_call wrappers
# --------------------------------------------------------------------------------------
def sparse_attention(x_bf, wq_f, wk_f, wv_f, rows, cols, mu_t, sig_t, dupf):
    b, t, e = x_bf.shape
    he = wq_f.shape[1]
    vs = rows.shape[1]
    k = mu_t.shape[2]
    return pl.pallas_call(
        _attn_kernel,
        out_shape=jax.ShapeDtypeStruct((b, he, t), jnp.float32),
        grid=(b,),
        in_specs=[
            pl.BlockSpec((1, t, e), lambda i: (i, 0, 0)),     # x (bf16)
            pl.BlockSpec((e, he), lambda i: (0, 0)),          # wq (bf16, scale folded)
            pl.BlockSpec((e, he), lambda i: (0, 0)),          # wk (bf16, scale folded)
            pl.BlockSpec((e, he), lambda i: (0, 0)),          # wv (bf16)
            pl.BlockSpec((1, vs, 1), lambda i: (i, 0, 0)),    # rows
            pl.BlockSpec((1, vs, 1), lambda i: (i, 0, 0)),    # cols
            pl.BlockSpec((1, 2, k), lambda i: (i, 0, 0)),     # means
            pl.BlockSpec((1, 2, k), lambda i: (i, 0, 0)),     # sigmas
            pl.BlockSpec((1, vs, 1), lambda i: (i, 0, 0)),    # duplicate mask
        ],
        out_specs=pl.BlockSpec((1, he, t), lambda i: (i, 0, 0)),
        compiler_params=pltpu.CompilerParams(
            dimension_semantics=("parallel",),
            # explicit budget so the fused per-batch block also fits v7x's 64 MiB VMEM
            vmem_limit_bytes=64 * 1024 * 1024),
    )(x_bf, wq_f, wk_f, wv_f, rows, cols, mu_t, sig_t, dupf)


def _pick_row_tile(n):
    for c in (512, 256, 128, 64, 32, 16, 8):
        if n % c == 0 and n // c >= 2:
            return c
    return n


def unify_heads(xmat, w_bf, bias):
    n, f = xmat.shape
    e = w_bf.shape[1]
    tm = _pick_row_tile(n)
    return pl.pallas_call(
        _unify_kernel,
        out_shape=jax.ShapeDtypeStruct((n, e), jnp.float32),
        grid=(n // tm,),
        in_specs=[
            pl.BlockSpec((tm, f), lambda i: (i, 0)),
            pl.BlockSpec((f, e), lambda i: (0, 0)),
            pl.BlockSpec((1, e), lambda i: (0, 0)),
        ],
        out_specs=pl.BlockSpec((tm, e), lambda i: (i, 0)),
        compiler_params=pltpu.CompilerParams(dimension_semantics=("parallel",)),
    )(xmat, w_bf, bias)


# --------------------------------------------------------------------------------------
# Glue re-implementations of sparse/util helpers (plain JAX)
# --------------------------------------------------------------------------------------
def ngenerate(key, means, gadditional, radditional, rng, relative_range):
    """Integer index tuples around the continuous means: 4 nearest neighbours,
    `gadditional` global uniform samples, `radditional` samples in a local region."""
    b, n, k, rank = means.shape
    rngf = jnp.array(rng, jnp.float32)
    rrf = jnp.array(relative_range, jnp.float32)

    fl = jnp.floor(means)
    ce = jnp.ceil(means)
    neigh = jnp.stack([
        jnp.stack([fl[..., 0], fl[..., 1]], axis=-1),
        jnp.stack([fl[..., 0], ce[..., 1]], axis=-1),
        jnp.stack([ce[..., 0], fl[..., 1]], axis=-1),
        jnp.stack([ce[..., 0], ce[..., 1]], axis=-1),
    ], axis=-2)                                                     # (b,n,k,4,2)

    kg, kr = jax.random.split(key)
    gl = jnp.floor(jax.random.uniform(kg, (b, n, k, gadditional, rank))
                   * (1.0 - EPSILON) * rngf)                        # global samples

    ctr = jnp.broadcast_to(jnp.round(means)[..., None, :], (b, n, k, radditional, rank))
    lower = ctr - rrf * 0.5
    upper = ctr + rrf * 0.5
    ctr = jnp.where(lower < 0.0, ctr - lower, ctr)                  # shift region into range
    ctr = jnp.where(upper > rngf, ctr - (upper - rngf), ctr)
    loc = jnp.floor(jax.random.uniform(kr, (b, n, k, radditional, rank))
                    * (1.0 - EPSILON) * rrf) + (ctr - rrf * 0.5)    # local samples

    ints = jnp.concatenate([neigh, gl, loc], axis=-2)               # (b,n,k,4+ga+ra,2)
    vs = k * (4 + gadditional + radditional)
    return ints.reshape(b, n, vs, rank).astype(jnp.int32)


def nduplicates(indices, t):
    """Mark every index tuple that already occurred earlier in its set (keep first)."""
    b, n, vs, _ = indices.shape
    code = indices[..., 0] * t + indices[..., 1]                    # (b,n,vs)
    eq = code[..., :, None] == code[..., None, :]                   # (b,n,vs,vs)
    earlier = jnp.tril(jnp.ones((vs, vs), bool), k=-1)
    return jnp.any(eq & earlier, axis=-1)                           # (b,n,vs) bool


# --------------------------------------------------------------------------------------
# Module
# --------------------------------------------------------------------------------------
class MSparseSelfAttentionPallas:
    def __init__(self, emb, k, gadditional, radditional, region, heads=8,
                 mask=False, min_sigma=0.05, sigma_scale=1.0, *, key):
        self.emb, self.heads, self.mask = emb, heads, mask
        self.min_sigma, self.sigma_scale = min_sigma, sigma_scale
        self.gadditional, self.radditional = gadditional, radditional
        self.region, self.k = region, k

        ks = jax.random.split(key, 7)
        lim = 1.0 / math.sqrt(emb)
        wq = jax.random.uniform(ks[0], (heads * emb, emb), jnp.float32, -lim, lim)
        wk = jax.random.uniform(ks[1], (heads * emb, emb), jnp.float32, -lim, lim)
        wv = jax.random.uniform(ks[2], (heads * emb, emb), jnp.float32, -lim, lim)
        limu = 1.0 / math.sqrt(heads * emb)
        wu = jax.random.uniform(ks[3], (emb, heads * emb), jnp.float32, -limu, limu)
        self.bu = jax.random.uniform(ks[4], (emb,), jnp.float32, -limu, limu)
        self.means = jax.random.normal(ks[5], (k, 2), jnp.float32)
        self.sigmas = jax.random.normal(ks[6], (k,), jnp.float32)
        self.mvalues = jnp.ones((k,), jnp.float32)

        # head-fused (E_in, H*E_out) layouts, bf16 for the MXU; the 1/e**0.25 query/key
        # scale is folded into the projection weights once at construction time.
        scale = 1.0 / (emb ** 0.25)
        self.wq_f = (wq.T * scale).astype(jnp.bfloat16)             # (E, H*E)
        self.wk_f = (wk.T * scale).astype(jnp.bfloat16)
        self.wv_f = wv.T.astype(jnp.bfloat16)
        self.wu_t_bf = wu.T.astype(jnp.bfloat16)                    # (H*E, E)

    def hyper(self, b, t):
        k = self.k
        means = jnp.broadcast_to(self.means[None, None], (b, 1, k, 2))
        means = means[..., ::-1]                                    # util.flip
        sz = jnp.array([t, t], jnp.float32)
        means = jax.nn.sigmoid(means) * (sz - 1.0)                  # transform_means (sigmoid)
        sig = jax.nn.softplus(self.sigmas + SIGMA_BOOST) + self.min_sigma
        sigmas = jnp.broadcast_to(sig[None, None, :, None], (b, 1, k, 2)) * sz
        sigmas = sigmas * self.sigma_scale                          # transform_sigmas
        return means, sigmas

    def __call__(self, x, sample_key):
        b, t, e = x.shape
        h, k = self.heads, self.k
        assert e == self.emb
        vs = k * (4 + self.radditional + self.gadditional)

        means, sigmas = self.hyper(b, t)
        indices = ngenerate(sample_key, means, self.gadditional, self.radditional,
                            rng=(t, t), relative_range=(self.region, self.region))
        indices = indices[..., ::-1]                                # util.flip
        indices = jnp.clip(indices, 0, t - 1)                       # safety clamp
        assert indices.shape == (b, 1, vs, 2)
        dups = nduplicates(indices, t)                              # (b,1,vs) bool

        rows = indices.reshape(b, vs, 2)[..., 0:1]                  # (b, vs, 1)
        cols = indices.reshape(b, vs, 2)[..., 1:2]
        mu_t = jnp.swapaxes(means.reshape(b, k, 2), 1, 2)           # (b, 2, k)
        sig_t = jnp.swapaxes(sigmas.reshape(b, k, 2), 1, 2)
        dupf = dups.reshape(b, vs, 1).astype(jnp.float32)

        # fused Pallas kernel: entry weights + all-heads sparse attention
        out_scr = sparse_attention(x.astype(jnp.bfloat16),
                                   self.wq_f, self.wk_f, self.wv_f,
                                   rows, cols, mu_t, sig_t, dupf)   # (b, h*e, t)

        # (b, h*e, t) flattens to exactly the reference's transpose(1,2).view(b,t,h*e)
        # ordering, so this reshape is a free (metadata-only) bitcast — no HBM permute.
        y = unify_heads(out_scr.reshape(b * t, h * e), self.wu_t_bf, self.bu[None, :])
        return y.reshape(b, t, e)


# --------------------------------------------------------------------------------------
# Pure-JAX reference (for validation only; mirrors the kernel's bf16 cast points so the
# comparison isolates implementation correctness rather than bf16 rounding)
# --------------------------------------------------------------------------------------
def reference_forward(m, x, sample_key):
    b, t, e = x.shape
    h, k = m.heads, m.k
    means, sigmas = m.hyper(b, t)
    indices = ngenerate(sample_key, means, m.gadditional, m.radditional,
                        rng=(t, t), relative_range=(m.region, m.region))[..., ::-1]
    indices = jnp.clip(indices, 0, t - 1)
    indfl = indices.astype(jnp.float32)
    dups = nduplicates(indices, t)

    diff = indfl[:, :, :, None, :] - means[:, :, None, :, :]
    quad = jnp.sum(diff * diff / (sigmas[:, :, None, :, :] + EPSILON), axis=-1)
    props = jnp.exp(-0.5 * quad)
    props = jnp.where(dups[..., None], 0.0, props)
    props = props / (jnp.sum(props, axis=2, keepdims=True) + EPSILON)
    weights = jnp.sum(props, axis=3)                                # (b,1,vs)

    rows = indices[:, 0, :, 0]
    cols = indices[:, 0, :, 1]
    w = weights[:, 0, :]

    xq = x.astype(jnp.bfloat16).astype(jnp.float32)
    wqf = m.wq_f.astype(jnp.float32).reshape(e, h, e)
    wkf = m.wk_f.astype(jnp.float32).reshape(e, h, e)
    wvf = m.wv_f.astype(jnp.float32).reshape(e, h, e)
    q = jnp.einsum('bte,ehf->bhtf', xq, wqf).astype(jnp.bfloat16).astype(jnp.float32)
    kk = jnp.einsum('bte,ehf->bhtf', xq, wkf).astype(jnp.bfloat16).astype(jnp.float32)
    v = jnp.einsum('bte,ehf->bhtf', xq, wvf).astype(jnp.bfloat16).astype(jnp.float32)

    sq = jnp.take_along_axis(q, rows[:, None, :, None], axis=2)
    sk = jnp.take_along_axis(kk, cols[:, None, :, None], axis=2)
    sv = jnp.take_along_axis(v, cols[:, None, :, None], axis=2)
    dot = jnp.sum(sq * sk, axis=-1)                                 # (b,h,vs)
    wd = w[:, None, :] * dot

    onehot = (rows[:, :, None] == jnp.arange(t)[None, None, :])     # (b,vs,t)
    vals = jnp.where(onehot[:, None, :, :], wd[..., None], NEG_INF)
    mx = jnp.max(vals, axis=2, keepdims=True)
    sm = jnp.sum(jnp.where(onehot[:, None, :, :], jnp.exp(wd[..., None] - mx), 0.0),
                 axis=2, keepdims=True)
    lse = (mx + jnp.log(sm))[:, :, 0, :]                            # (b,h,t)
    lse_e = jnp.take_along_axis(lse, rows[:, None, :], axis=2)
    logp = wd - lse_e

    mlog = (logp[..., None] * sv).astype(jnp.bfloat16).astype(jnp.float32)
    out = jnp.einsum('bvt,bhve->bhte', onehot.astype(jnp.float32), mlog)
    out = out.reshape(b * h, t, e)
    out = jnp.swapaxes(out, 1, 2).reshape(b, t, h * e)              # literal reference scramble
    out = out.astype(jnp.bfloat16).astype(jnp.float32)
    y = out.reshape(b * t, h * e) @ m.wu_t_bf.astype(jnp.float32) + m.bu[None, :]
    return y.reshape(b, t, e)


# --------------------------------------------------------------------------------------
if __name__ == "__main__":
    b, t, emb = 2, 8, 16
    heads, k = 4, 4
    gadditional, radditional, region = 2, 2, 4

    key = jax.random.PRNGKey(0)
    pkey, xkey, skey = jax.random.split(key, 3)

    module = MSparseSelfAttentionPallas(emb, k, gadditional, radditional, region,
                                        heads=heads, mask=False, key=pkey)
    x = jax.random.normal(xkey, (b, t, emb), jnp.float32)

    y = module(x, skey)
    y = jax.block_until_ready(y)

    assert y.shape == (b, t, emb), y.shape
    assert bool(jnp.all(jnp.isfinite(y)))

    y_ref = reference_forward(module, x, skey)
    max_err = float(jnp.max(jnp.abs(y - y_ref)))
    assert jnp.allclose(y, y_ref, atol=2e-2, rtol=2e-2), f"max abs err {max_err}"

    print("KERNEL_OK")
</pallas_src>

<mosaic_0001>
module attributes {stable_mosaic.version = 11 : i64} {
  func.func @_attn_kernel(%arg0: i32, %arg1: memref<1x8x16xbf16, #tpu.memory_space<vmem>>, %arg2: memref<16x64xbf16, #tpu.memory_space<vmem>>, %arg3: memref<16x64xbf16, #tpu.memory_space<vmem>>, %arg4: memref<16x64xbf16, #tpu.memory_space<vmem>>, %arg5: memref<1x32x1xi32, #tpu.memory_space<vmem>>, %arg6: memref<1x32x1xi32, #tpu.memory_space<vmem>>, %arg7: memref<1x2x4xf32, #tpu.memory_space<vmem>>, %arg8: memref<1x2x4xf32, #tpu.memory_space<vmem>>, %arg9: memref<1x32x1xf32, #tpu.memory_space<vmem>>, %arg10: memref<1x64x8xf32, #tpu.memory_space<vmem>>) attributes {dimension_semantics = [#tpu.dimension_semantics<parallel>], iteration_bounds = array<i64: 2>, scalar_prefetch = 0 : i64, scratch_operands = 0 : i64, tpu.core_type = #tpu.core_type<tc>, window_params = [{transform_indices = @transform_0, window_bounds = array<i64: 1, 8, 16>}, {pipeline_mode = #tpu.pipeline_mode<synchronous>, transform_indices = @transform_1, window_bounds = array<i64: 16, 64>}, {pipeline_mode = #tpu.pipeline_mode<synchronous>, transform_indices = @transform_2, window_bounds = array<i64: 16, 64>}, {pipeline_mode = #tpu.pipeline_mode<synchronous>, transform_indices = @transform_3, window_bounds = array<i64: 16, 64>}, {transform_indices = @transform_4, window_bounds = array<i64: 1, 32, 1>}, {transform_indices = @transform_5, window_bounds = array<i64: 1, 32, 1>}, {transform_indices = @transform_6, window_bounds = array<i64: 1, 2, 4>}, {transform_indices = @transform_7, window_bounds = array<i64: 1, 2, 4>}, {transform_indices = @transform_8, window_bounds = array<i64: 1, 32, 1>}, {transform_indices = @transform_9, window_bounds = array<i64: 1, 64, 8>}]} {
    %c0 = arith.constant 0 : index
    %c0_0 = arith.constant 0 : index
    %c0_1 = arith.constant 0 : index
    %0 = vector.load %arg5[%c0, %c0_0, %c0_1] : memref<1x32x1xi32, #tpu.memory_space<vmem>>, vector<1x32x1xi32>
    %1 = vector.shape_cast %0 : vector<1x32x1xi32> to vector<32x1xi32>
    %c0_2 = arith.constant 0 : index
    %c0_3 = arith.constant 0 : index
    %c0_4 = arith.constant 0 : index
    %2 = vector.load %arg6[%c0_2, %c0_3, %c0_4] : memref<1x32x1xi32, #tpu.memory_space<vmem>>, vector<1x32x1xi32>
    %3 = vector.shape_cast %2 : vector<1x32x1xi32> to vector<32x1xi32>
    %c0_5 = arith.constant 0 : index
    %c0_6 = arith.constant 0 : index
    %c0_7 = arith.constant 0 : index
    %4 = vector.load %arg9[%c0_5, %c0_6, %c0_7] : memref<1x32x1xf32, #tpu.memory_space<vmem>>, vector<1x32x1xf32>
    %5 = vector.shape_cast %4 : vector<1x32x1xf32> to vector<32x1xf32>
    %c0_8 = arith.constant 0 : index
    %c0_9 = arith.constant 0 : index
    %c0_10 = arith.constant 0 : index
    %6 = vector.load %arg7[%c0_8, %c0_9, %c0_10] : memref<1x2x4xf32, #tpu.memory_space<vmem>>, vector<1x2x4xf32>
    %7 = vector.shape_cast %6 : vector<1x2x4xf32> to vector<2x4xf32>
    %c0_11 = arith.constant 0 : index
    %c0_12 = arith.constant 0 : index
    %c0_13 = arith.constant 0 : index
    %8 = vector.load %arg8[%c0_11, %c0_12, %c0_13] : memref<1x2x4xf32, #tpu.memory_space<vmem>>, vector<1x2x4xf32>
    %9 = vector.shape_cast %8 : vector<1x2x4xf32> to vector<2x4xf32>
    %10 = arith.sitofp %1 : vector<32x1xi32> to vector<32x1xf32>
    %11 = arith.sitofp %3 : vector<32x1xi32> to vector<32x1xf32>
    %12 = vector.extract_strided_slice %7 {offsets = [0, 0], sizes = [1, 4], strides = [1, 1]} : vector<2x4xf32> to vector<1x4xf32>
    %13 = vector.extract_strided_slice %7 {offsets = [1, 0], sizes = [1, 4], strides = [1, 1]} : vector<2x4xf32> to vector<1x4xf32>
    %14 = vector.extract_strided_slice %9 {offsets = [0, 0], sizes = [1, 4], strides = [1, 1]} : vector<2x4xf32> to vector<1x4xf32>
    %15 = vector.extract_strided_slice %9 {offsets = [1, 0], sizes = [1, 4], strides = [1, 1]} : vector<2x4xf32> to vector<1x4xf32>
    %16 = vector.broadcast %10 : vector<32x1xf32> to vector<32x4xf32>
    %17 = vector.broadcast %12 : vector<1x4xf32> to vector<32x4xf32>
    %18 = arith.subf %16, %17 : vector<32x4xf32>
    %19 = arith.mulf %18, %18 : vector<32x4xf32>
    %cst = arith.constant 1.000000e-07 : f32
    %20 = vector.broadcast %cst : f32 to vector<1x4xf32>
    %21 = arith.addf %14, %20 : vector<1x4xf32>
    %22 = vector.broadcast %21 : vector<1x4xf32> to vector<32x4xf32>
    %23 = arith.divf %19, %22 : vector<32x4xf32>
    %24 = vector.broadcast %11 : vector<32x1xf32> to vector<32x4xf32>
    %25 = vector.broadcast %13 : vector<1x4xf32> to vector<32x4xf32>
    %26 = arith.subf %24, %25 : vector<32x4xf32>
    %27 = arith.mulf %26, %26 : vector<32x4xf32>
    %cst_14 = arith.constant 1.000000e-07 : f32
    %28 = vector.broadcast %cst_14 : f32 to vector<1x4xf32>
    %29 = arith.addf %15, %28 : vector<1x4xf32>
    %30 = vector.broadcast %29 : vector<1x4xf32> to vector<32x4xf32>
    %31 = arith.divf %27, %30 : vector<32x4xf32>
    %32 = arith.addf %23, %31 : vector<32x4xf32>
    %cst_15 = arith.constant -5.000000e-01 : f32
    %33 = vector.broadcast %cst_15 : f32 to vector<32x4xf32>
    %34 = arith.mulf %33, %32 : vector<32x4xf32>
    %35 = math.exp %34 : vector<32x4xf32>
    %cst_16 = arith.constant 1.000000e+00 : f32
    %36 = vector.broadcast %cst_16 : f32 to vector<32x1xf32>
    %37 = arith.subf %36, %5 : vector<32x1xf32>
    %38 = vector.broadcast %37 : vector<32x1xf32> to vector<32x4xf32>
    %39 = arith.mulf %35, %38 : vector<32x4xf32>
    %cst_17 = arith.constant dense<0.000000e+00> : vector<4xf32>
    %40 = vector.multi_reduction <add>, %39, %cst_17 [0] : vector<32x4xf32> to vector<4xf32>
    %41 = vector.shape_cast %40 : vector<4xf32> to vector<1x4xf32>
    %cst_18 = arith.constant 1.000000e-07 : f32
    %42 = vector.broadcast %cst_18 : f32 to vector<1x4xf32>
    %43 = arith.addf %41, %42 : vector<1x4xf32>
    %44 = vector.broadcast %43 : vector<1x4xf32> to vector<32x4xf32>
    %45 = arith.divf %39, %44 : vector<32x4xf32>
    %cst_19 = arith.constant dense<0.000000e+00> : vector<32xf32>
    %46 = vector.multi_reduction <add>, %45, %cst_19 [1] : vector<32x4xf32> to vector<32xf32>
    %47 = vector.shape_cast %46 : vector<32xf32> to vector<32x1xf32>
    %c0_20 = arith.constant 0 : index
    %c0_21 = arith.constant 0 : index
    %c0_22 = arith.constant 0 : index
    %48 = vector.load %arg1[%c0_20, %c0_21, %c0_22] : memref<1x8x16xbf16, #tpu.memory_space<vmem>>, vector<1x8x16xbf16>
    %49 = vector.shape_cast %48 : vector<1x8x16xbf16> to vector<8x16xbf16>
    %c0_23 = arith.constant 0 : index
    %c0_24 = arith.constant 0 : index
    %50 = vector.load %arg2[%c0_23, %c0_24] : memref<16x64xbf16, #tpu.memory_space<vmem>>, vector<16x64xbf16>
    %cst_25 = arith.constant dense<0.000000e+00> : vector<8x64xf32>
    %51 = tpu.matmul %49, %50, %cst_25 {dimension_numbers = #tpu.dot_dimension_numbers<[1], [0], [0], [1], [0, 0, 1, 1], [], []>} : vector<8x16xbf16>, vector<16x64xbf16>, vector<8x64xf32> -> vector<8x64xf32>
    %52 = arith.truncf %51 : vector<8x64xf32> to vector<8x64xbf16>
    %c0_26 = arith.constant 0 : index
    %c0_27 = arith.constant 0 : index
    %53 = vector.load %arg3[%c0_26, %c0_27] : memref<16x64xbf16, #tpu.memory_space<vmem>>, vector<16x64xbf16>
    %cst_28 = arith.constant dense<0.000000e+00> : vector<8x64xf32>
    %54 = tpu.matmul %49, %53, %cst_28 {dimension_numbers = #tpu.dot_dimension_numbers<[1], [0], [0], [1], [0, 0, 1, 1], [], []>} : vector<8x16xbf16>, vector<16x64xbf16>, vector<8x64xf32> -> vector<8x64xf32>
    %55 = arith.truncf %54 : vector<8x64xf32> to vector<8x64xbf16>
    %c0_29 = arith.constant 0 : index
    %c0_30 = arith.constant 0 : index
    %56 = vector.load %arg4[%c0_29, %c0_30] : memref<16x64xbf16, #tpu.memory_space<vmem>>, vector<16x64xbf16>
    %cst_31 = arith.constant dense<0.000000e+00> : vector<8x64xf32>
    %57 = tpu.matmul %49, %56, %cst_31 {dimension_numbers = #tpu.dot_dimension_numbers<[1], [0], [0], [1], [0, 0, 1, 1], [], []>} : vector<8x16xbf16>, vector<16x64xbf16>, vector<8x64xf32> -> vector<8x64xf32>
    %58 = arith.truncf %57 : vector<8x64xf32> to vector<8x64xbf16>
    %59 = tpu.iota {dimensions = array<i32: 1>} : vector<32x8xi32>
    %60 = vector.broadcast %1 : vector<32x1xi32> to vector<32x8xi32>
    %61 = arith.cmpi eq, %60, %59 : vector<32x8xi32>
    %62 = vector.broadcast %3 : vector<32x1xi32> to vector<32x8xi32>
    %63 = arith.cmpi eq, %62, %59 : vector<32x8xi32>
    %64 = arith.extui %61 : vector<32x8xi1> to vector<32x8xi32>
    %65 = arith.sitofp %64 : vector<32x8xi32> to vector<32x8xf32>
    %66 = arith.truncf %65 : vector<32x8xf32> to vector<32x8xbf16>
    %67 = arith.extui %63 : vector<32x8xi1> to vector<32x8xi32>
    %68 = arith.sitofp %67 : vector<32x8xi32> to vector<32x8xf32>
    %69 = arith.truncf %68 : vector<32x8xf32> to vector<32x8xbf16>
    %cst_32 = arith.constant dense<0.000000e+00> : vector<32x64xf32>
    %70 = tpu.matmul %66, %52, %cst_32 {dimension_numbers = #tpu.dot_dimension_numbers<[1], [0], [0], [1], [0, 0, 1, 1], [], []>} : vector<32x8xbf16>, vector<8x64xbf16>, vector<32x64xf32> -> vector<32x64xf32>
    %cst_33 = arith.constant dense<0.000000e+00> : vector<32x64xf32>
    %71 = tpu.matmul %69, %55, %cst_33 {dimension_numbers = #tpu.dot_dimension_numbers<[1], [0], [0], [1], [0, 0, 1, 1], [], []>} : vector<32x8xbf16>, vector<8x64xbf16>, vector<32x64xf32> -> vector<32x64xf32>
    %cst_34 = arith.constant dense<0.000000e+00> : vector<32x64xf32>
    %72 = tpu.matmul %69, %58, %cst_34 {dimension_numbers = #tpu.dot_dimension_numbers<[1], [0], [0], [1], [0, 0, 1, 1], [], []>} : vector<32x8xbf16>, vector<8x64xbf16>, vector<32x64xf32> -> vector<32x64xf32>
    %73 = tpu.iota {dimensions = array<i32: 0>} : vector<64x4xi32>
    %74 = tpu.iota {dimensions = array<i32: 1>} : vector<64x4xi32>
    %c16_i32 = arith.constant 16 : i32
    %75 = vector.broadcast %c16_i32 : i32 to vector<64x4xi32>
    %76 = arith.muli %74, %75 : vector<64x4xi32>
    %77 = arith.cmpi sge, %73, %76 : vector<64x4xi32>
    %c1_i32 = arith.constant 1 : i32
    %78 = vector.broadcast %c1_i32 : i32 to vector<64x4xi32>
    %79 = arith.addi %74, %78 : vector<64x4xi32>
    %c16_i32_35 = arith.constant 16 : i32
    %80 = vector.broadcast %c16_i32_35 : i32 to vector<64x4xi32>
    %81 = arith.muli %79, %80 : vector<64x4xi32>
    %82 = arith.cmpi slt, %73, %81 : vector<64x4xi32>
    %83 = arith.andi %77, %82 : vector<64x4xi1>
    %84 = arith.extui %83 : vector<64x4xi1> to vector<64x4xi32>
    %85 = arith.sitofp %84 : vector<64x4xi32> to vector<64x4xf32>
    %86 = arith.mulf %70, %71 : vector<32x64xf32>
    %cst_36 = arith.constant dense<0.000000e+00> : vector<32x4xf32>
    %87 = tpu.matmul %86, %85, %cst_36 {dimension_numbers = #tpu.dot_dimension_numbers<[1], [0], [0], [1], [0, 0, 1, 1], [], []>} : vector<32x64xf32>, vector<64x4xf32>, vector<32x4xf32> -> vector<32x4xf32>
    %88 = vector.broadcast %47 : vector<32x1xf32> to vector<32x4xf32>
    %89 = arith.mulf %88, %87 : vector<32x4xf32>
    %90 = vector.extract_strided_slice %89 {offsets = [0, 0], sizes = [32, 1], strides = [1, 1]} : vector<32x4xf32> to vector<32x1xf32>
    %cst_37 = arith.constant -1.000000e+30 : f32
    %91 = vector.shape_cast %90 : vector<32x1xf32> to vector<32x1xf32>
    %92 = vector.broadcast %91 : vector<32x1xf32> to vector<32x8xf32>
    %93 = vector.broadcast %cst_37 : f32 to vector<32x8xf32>
    %94 = arith.select %61, %92, %93 : vector<32x8xi1>, vector<32x8xf32>
    %cst_38 = arith.constant dense<0xFF800000> : vector<8xf32>
    %95 = vector.multi_reduction <maximumf>, %94, %cst_38 [0] : vector<32x8xf32> to vector<8xf32>
    %96 = vector.shape_cast %95 : vector<8xf32> to vector<1x8xf32>
    %97 = vector.extract_strided_slice %89 {offsets = [0, 1], sizes = [32, 1], strides = [1, 1]} : vector<32x4xf32> to vector<32x1xf32>
    %cst_39 = arith.constant -1.000000e+30 : f32
    %98 = vector.shape_cast %97 : vector<32x1xf32> to vector<32x1xf32>
    %99 = vector.broadcast %98 : vector<32x1xf32> to vector<32x8xf32>
    %100 = vector.broadcast %cst_39 : f32 to vector<32x8xf32>
    %101 = arith.select %61, %99, %100 : vector<32x8xi1>, vector<32x8xf32>
    %cst_40 = arith.constant dense<0xFF800000> : vector<8xf32>
    %102 = vector.multi_reduction <maximumf>, %101, %cst_40 [0] : vector<32x8xf32> to vector<8xf32>
    %103 = vector.shape_cast %102 : vector<8xf32> to vector<1x8xf32>
    %104 = vector.extract_strided_slice %89 {offsets = [0, 2], sizes = [32, 1], strides = [1, 1]} : vector<32x4xf32> to vector<32x1xf32>
    %cst_41 = arith.constant -1.000000e+30 : f32
    %105 = vector.shape_cast %104 : vector<32x1xf32> to vector<32x1xf32>
    %106 = vector.broadcast %105 : vector<32x1xf32> to vector<32x8xf32>
    %107 = vector.broadcast %cst_41 : f32 to vector<32x8xf32>
    %108 = arith.select %61, %106, %107 : vector<32x8xi1>, vector<32x8xf32>
    %cst_42 = arith.constant dense<0xFF800000> : vector<8xf32>
    %109 = vector.multi_reduction <maximumf>, %108, %cst_42 [0] : vector<32x8xf32> to vector<8xf32>
    %110 = vector.shape_cast %109 : vector<8xf32> to vector<1x8xf32>
    %111 = vector.extract_strided_slice %89 {offsets = [0, 3], sizes = [32, 1], strides = [1, 1]} : vector<32x4xf32> to vector<32x1xf32>
    %cst_43 = arith.constant -1.000000e+30 : f32
    %112 = vector.shape_cast %111 : vector<32x1xf32> to vector<32x1xf32>
    %113 = vector.broadcast %112 : vector<32x1xf32> to vector<32x8xf32>
    %114 = vector.broadcast %cst_43 : f32 to vector<32x8xf32>
    %115 = arith.select %61, %113, %114 : vector<32x8xi1>, vector<32x8xf32>
    %cst_44 = arith.constant dense<0xFF800000> : vector<8xf32>
    %116 = vector.multi_reduction <maximumf>, %115, %cst_44 [0] : vector<32x8xf32> to vector<8xf32>
    %117 = vector.shape_cast %116 : vector<8xf32> to vector<1x8xf32>
    %118 = tpu.concatenate %96, %103, %110, %117 in 0 : vector<1x8xf32>, vector<1x8xf32>, vector<1x8xf32>, vector<1x8xf32> -> vector<4x8xf32>
    %cst_45 = arith.constant dense<0.000000e+00> : vector<32x4xf32>
    %119 = tpu.matmul %65, %118, %cst_45 {dimension_numbers = #tpu.dot_dimension_numbers<[1], [1], [0], [0], [0, 0, 1, 0], [], []>} : vector<32x8xf32>, vector<4x8xf32>, vector<32x4xf32> -> vector<32x4xf32>
    %120 = arith.subf %89, %119 : vector<32x4xf32>
    %121 = math.exp %120 : vector<32x4xf32>
    %cst_46 = arith.constant dense<0.000000e+00> : vector<4x8xf32>
    %122 = tpu.matmul %121, %65, %cst_46 {dimension_numbers = #tpu.dot_dimension_numbers<[0], [0], [1], [1], [0, 1, 1, 1], [], []>} : vector<32x4xf32>, vector<32x8xf32>, vector<4x8xf32> -> vector<4x8xf32>
    %cst_47 = arith.constant 0.000000e+00 : f32
    %123 = vector.broadcast %cst_47 : f32 to vector<4x8xf32>
    %124 = arith.cmpf ogt, %122, %123 : vector<4x8xf32>
    %125 = math.log %122 : vector<4x8xf32>
    %126 = arith.addf %118, %125 : vector<4x8xf32>
    %cst_48 = arith.constant 0.000000e+00 : f32
    %127 = vector.broadcast %cst_48 : f32 to vector<4x8xf32>
    %128 = arith.select %124, %126, %127 : vector<4x8xi1>, vector<4x8xf32>
    %cst_49 = arith.constant dense<0.000000e+00> : vector<32x4xf32>
    %129 = tpu.matmul %65, %128, %cst_49 {dimension_numbers = #tpu.dot_dimension_numbers<[1], [1], [0], [0], [0, 0, 1, 0], [], []>} : vector<32x8xf32>, vector<4x8xf32>, vector<32x4xf32> -> vector<32x4xf32>
    %130 = arith.subf %89, %129 : vector<32x4xf32>
    %cst_50 = arith.constant dense<0.000000e+00> : vector<32x64xf32>
    %131 = tpu.matmul %130, %85, %cst_50 {dimension_numbers = #tpu.dot_dimension_numbers<[1], [1], [0], [0], [0, 0, 1, 0], [], []>} : vector<32x4xf32>, vector<64x4xf32>, vector<32x64xf32> -> vector<32x64xf32>
    %132 = arith.mulf %131, %72 : vector<32x64xf32>
    %133 = arith.truncf %132 : vector<32x64xf32> to vector<32x64xbf16>
    %cst_51 = arith.constant dense<0.000000e+00> : vector<64x8xf32>
    %134 = tpu.matmul %133, %66, %cst_51 {dimension_numbers = #tpu.dot_dimension_numbers<[0], [0], [1], [1], [0, 1, 1, 1], [], []>} : vector<32x64xbf16>, vector<32x8xbf16>, vector<64x8xf32> -> vector<64x8xf32>
    %c0_52 = arith.constant 0 : index
    %c0_53 = arith.constant 0 : index
    %c0_54 = arith.constant 0 : index
    %135 = vector.load %arg10[%c0_52, %c0_53, %c0_54] : memref<1x64x8xf32, #tpu.memory_space<vmem>>, vector<1x64x8xf32>
    %136 = vector.shape_cast %135 : vector<1x64x8xf32> to vector<64x8xf32>
    %137 = vector.shape_cast %134 : vector<64x8xf32> to vector<1x64x8xf32>
    tpu.vector_store %arg10[%c0_52, %c0_53, %c0_54], %137 {strides = array<i32>} : memref<1x64x8xf32, #tpu.memory_space<vmem>>, vector<1x64x8xf32>,
    return
  }
  func.func @transform_0(%arg0: i32) -> (i32, i32, i32) {
    %c0_i32 = arith.constant 0 : i32
    %c0_i32_0 = arith.constant 0 : i32
    %c0_i32_1 = arith.constant 0 : i32
    return %arg0, %c0_i32, %c0_i32_0 : i32, i32, i32
  }
  func.func @transform_1(%arg0: i32) -> (i32, i32) {
    %c0_i32 = arith.constant 0 : i32
    %c0_i32_0 = arith.constant 0 : i32
    %c0_i32_1 = arith.constant 0 : i32
    return %c0_i32, %c0_i32_0 : i32, i32
  }
  func.func @transform_2(%arg0: i32) -> (i32, i32) {
    %c0_i32 = arith.constant 0 : i32
    %c0_i32_0 = arith.constant 0 : i32
    %c0_i32_1 = arith.constant 0 : i32
    return %c0_i32, %c0_i32_0 : i32, i32
  }
  func.func @transform_3(%arg0: i32) -> (i32, i32) {
    %c0_i32 = arith.constant 0 : i32
    %c0_i32_0 = arith.constant 0 : i32
    %c0_i32_1 = arith.constant 0 : i32
    return %c0_i32, %c0_i32_0 : i32, i32
  }
  func.func @transform_4(%arg0: i32) -> (i32, i32, i32) {
    %c0_i32 = arith.constant 0 : i32
    %c0_i32_0 = arith.constant 0 : i32
    %c0_i32_1 = arith.constant 0 : i32
    return %arg0, %c0_i32, %c0_i32_0 : i32, i32, i32
  }
  func.func @transform_5(%arg0: i32) -> (i32, i32, i32) {
    %c0_i32 = arith.constant 0 : i32
    %c0_i32_0 = arith.constant 0 : i32
    %c0_i32_1 = arith.constant 0 : i32
    return %arg0, %c0_i32, %c0_i32_0 : i32, i32, i32
  }
  func.func @transform_6(%arg0: i32) -> (i32, i32, i32) {
    %c0_i32 = arith.constant 0 : i32
    %c0_i32_0 = arith.constant 0 : i32
    %c0_i32_1 = arith.constant 0 : i32
    return %arg0, %c0_i32, %c0_i32_0 : i32, i32, i32
  }
  func.func @transform_7(%arg0: i32) -> (i32, i32, i32) {
    %c0_i32 = arith.constant 0 : i32
    %c0_i32_0 = arith.constant 0 : i32
    %c0_i32_1 = arith.constant 0 : i32
    return %arg0, %c0_i32, %c0_i32_0 : i32, i32, i32
  }
  func.func @transform_8(%arg0: i32) -> (i32, i32, i32) {
    %c0_i32 = arith.constant 0 : i32
    %c0_i32_0 = arith.constant 0 : i32
    %c0_i32_1 = arith.constant 0 : i32
    return %arg0, %c0_i32, %c0_i32_0 : i32, i32, i32
  }
  func.func @transform_9(%arg0: i32) -> (i32, i32, i32) {
    %c0_i32 = arith.constant 0 : i32
    %c0_i32_0 = arith.constant 0 : i32
    %c0_i32_1 = arith.constant 0 : i32
    return %arg0, %c0_i32, %c0_i32_0 : i32, i32, i32
  }
}

</mosaic_0001>

<llo_original>
// kernel: tpu_custom_call.1
$region0: #{tpu_custom_call.1}
  #allocation0 [shape = 'u32[]', space=smem, size = 0x4, offset = 0x4, fixed_abs, tag = 'smem constant byte address 0x4 - core index']
  #allocation1 [shape = 'u32[144,128]{1,0:T(1,128)}', space=vmem, size = 0x12000, scoped, tag = 'internal scratch']
  %s0 = inlined_call_operand.hbm [shape: bf16[2,8,16], index: 0, kind: input, shape index: {}]
  %s1 = inlined_call_operand.hbm [shape: bf16[16,64], index: 1, kind: input, shape index: {}]
  %s2 = inlined_call_operand.hbm [shape: bf16[16,64], index: 2, kind: input, shape index: {}]
  %s3 = inlined_call_operand.hbm [shape: bf16[16,64], index: 3, kind: input, shape index: {}]
  %s4 = inlined_call_operand.hbm [shape: s32[2,32,1], index: 4, kind: input, shape index: {}]
  %s5 = inlined_call_operand.hbm [shape: s32[2,32,1], index: 5, kind: input, shape index: {}]
  %s6 = inlined_call_operand.hbm [shape: f32[2,2,4], index: 6, kind: input, shape index: {}]
  %s7 = inlined_call_operand.hbm [shape: f32[2,2,4], index: 7, kind: input, shape index: {}]
  %s8 = inlined_call_operand.hbm [shape: f32[2,32,1], index: 8, kind: input, shape index: {}]
  %s9 = inlined_call_operand.hbm [shape: f32[2,64,8], index: 9, kind: output, shape index: {}]
  %s10 = sld [smem:[#allocation0]]
  $region105: #{tpu_custom_call.1} parent=0
    _
  %s12 = ssub.s32 1, %s10
  %s13 = scalar_select 0, %s12, %s10
  $region1: #{tpu_custom_call.1} parent=0
    #allocation2 [shape = 'u8[4096]{0}', space=vmem, size = 0x1000, scoped, tag = 'input window, operand 0']
    #allocation3 [shape = 's32[2]{0}', space=sflag, size = 0x8, scoped, tag = 'scoped memory for tpu_custom_call.1']
    #allocation4 [shape = 's32[2]{0}', space=sflag, size = 0x8, scoped, tag = 'scoped memory for tpu_custom_call.1']
    #allocation5 [shape = 'u8[4096]{0}', space=vmem, size = 0x1000, scoped, tag = 'input window, operand 1, single buffered']
    #allocation6 [shape = 's32[1]{0}', space=sflag, size = 0x4, scoped, tag = 'scoped memory for tpu_custom_call.1']
    #allocation7 [shape = 'u8[4096]{0}', space=vmem, size = 0x1000, scoped, tag = 'input window, operand 2, single buffered']
    #allocation8 [shape = 'u8[4096]{0}', space=vmem, size = 0x1000, scoped, tag = 'input window, operand 3, single buffered']
    #allocation9 [shape = 's32[1]{0}', space=sflag, size = 0x4, scoped, tag = 'scoped memory for tpu_custom_call.1']
    #allocation10 [shape = 'u8[32768]{0}', space=vmem, size = 0x8000, scoped, tag = 'input window, operand 4']
    #allocation11 [shape = 'u8[32768]{0}', space=vmem, size = 0x8000, scoped, tag = 'input window, operand 5']
    #allocation12 [shape = 'u8[2048]{0}', space=vmem, size = 0x800, scoped, tag = 'input window, operand 6']
    #allocation13 [shape = 'u8[2048]{0}', space=vmem, size = 0x800, scoped, tag = 'input window, operand 7']
    #allocation14 [shape = 'u8[32768]{0}', space=vmem, size = 0x8000, scoped, tag = 'input window, operand 8']
    #allocation15 [shape = 'u8[65536]{0}', space=vmem, size = 0x10000, scoped, tag = 'output window, operand 0']
    %14 = vsyncpa [#allocation3], 0
    %s15 = scalar_lea.sflag [#allocation3], 1
    %16 = vsyncpa %s15, 0
    %17 = vsyncpa [#allocation6], 0
    %18 = vsyncpa [#allocation9], 0
    %19 = vsyncpa [#allocation4], 0
    %s20 = scalar_lea.sflag [#allocation4], 1
    %21 = vsyncpa %s20, 0
    loop: start=0, step=1, limit=4
    $region2: #{tpu_custom_call.1} parent=1 // loop_pre_header
      _
    $region3: #{tpu_custom_call.1} parent=1 // loop_header
      %s23 = sphi 0, %s27
      %p24 = scmp.ge.s32.totalorder %s23, 4
      %s33 = sphi 0, %s35
      %s36 = sphi 0, %s33
      %s37 = sphi 0, %s36
      %s53 = sphi 0, %s37
      %s57 = sphi 0, %s57
      %s59 = sphi 0, %s57
      %s60 = sphi 0, %s59
      %s74 = sphi 0, %s60
      %s78 = sphi 0, %s78
      %s80 = sphi 0, %s78
      %s81 = sphi 0, %s80
      %s95 = sphi 0, %s81
      %s99 = sphi 0, %s99
      %s101 = sphi 0, %s99
      %s102 = sphi 0, %s101
      %s116 = sphi 0, %s102
      %s122 = sphi 0, %s124
      %s125 = sphi 0, %s122
      %s126 = sphi 0, %s125
      %s142 = sphi 0, %s126
      %s148 = sphi 0, %s150
      %s151 = sphi 0, %s148
      %s152 = sphi 0, %s151
      %s168 = sphi 0, %s152
      %s174 = sphi 0, %s176
      %s177 = sphi 0, %s174
      %s178 = sphi 0, %s177
      %s194 = sphi 0, %s178
      %s200 = sphi 0, %s202
      %s203 = sphi 0, %s200
      %s204 = sphi 0, %s203
      %s220 = sphi 0, %s204
      %s226 = sphi 0, %s228
      %s229 = sphi 0, %s226
      %s230 = sphi 0, %s229
      %s246 = sphi 0, %s230
      %s252 = sphi 0, %s254
      %s255 = sphi 0, %s252
      %s256 = sphi 0, %s255
      %s272 = sphi 0, %s256
    $region4: #{tpu_custom_call.1} parent=1 // loop_header_branch
      %26 = sbr.rel (%p24) target = $region8
    $region5: #{tpu_custom_call.1} parent=1 // loop_body
      %s28 = ssub.s32 %s23, 1
      %s29 = ssub.s32 %s23, 2
      %s30 = sadd.s32 %s23, 1
      %s31 = ssub.s32 %s23, %s30
      %p32 = scmp.eq.s32.totalorder %s31, 0
      %s34 = sadd.s32 %s33, 1
      %s35 = scalar_select %p32, %s33, %s34
      %p38 = pneg %p32
      %p39 = scmp.eq.s32.totalorder %s23, 1
      %p40 = por %p38, %p39
      %p41 = scmp.ne.s32.totalorder %s33, %s36
      %p42 = scmp.eq.s32.totalorder %s23, 0
      %p43 = por %p41, %p42
      %p44 = scmp.ne.s32.totalorder %s33, %s36
      %p45 = scmp.eq.s32.totalorder %s28, 1
      %p46 = por %p44, %p45
      %p47 = scmp.ne.s32.totalorder %s36, %s37
      %p48 = scmp.eq.s32.totalorder %s28, 0
      %p49 = por %p47, %p48
      %p50 = scmp.ne.s32.totalorder %s36, %s37
      %p51 = scmp.eq.s32.totalorder %s29, 1
      %p52 = por %p50, %p51
      %p54 = scmp.ne.s32.totalorder %s37, %s53
      %p55 = scmp.eq.s32.totalorder %s29, 0
      %p56 = por %p54, %p55
      %s58 = sadd.s32 %s57, 1
      %p61 = scmp.eq.s32.totalorder %s23, 1
      %p62 = scmp.ne.s32.totalorder %s57, %s59
      %p63 = scmp.eq.s32.totalorder %s23, 0
      %p64 = por %p62, %p63
      %p65 = scmp.ne.s32.totalorder %s57, %s59
      %p66 = scmp.eq.s32.totalorder %s28, 1
      %p67 = por %p65, %p66
      %p68 = scmp.ne.s32.totalorder %s59, %s60
      %p69 = scmp.eq.s32.totalorder %s28, 0
      %p70 = por %p68, %p69
      %p71 = scmp.ne.s32.totalorder %s59, %s60
      %p72 = scmp.eq.s32.totalorder %s29, 1
      %p73 = por %p71, %p72
      %p75 = scmp.ne.s32.totalorder %s60, %s74
      %p76 = scmp.eq.s32.totalorder %s29, 0
      %p77 = por %p75, %p76
      %s79 = sadd.s32 %s78, 1
      %p82 = scmp.eq.s32.totalorder %s23, 1
      %p83 = scmp.ne.s32.totalorder %s78, %s80
      %p84 = scmp.eq.s32.totalorder %s23, 0
      %p85 = por %p83, %p84
      %p86 = scmp.ne.s32.totalorder %s78, %s80
      %p87 = scmp.eq.s32.totalorder %s28, 1
      %p88 = por %p86, %p87
      %p89 = scmp.ne.s32.totalorder %s80, %s81
      %p90 = scmp.eq.s32.totalorder %s28, 0
      %p91 = por %p89, %p90
      %p92 = scmp.ne.s32.totalorder %s80, %s81
      %p93 = scmp.eq.s32.totalorder %s29, 1
      %p94 = por %p92, %p93
      %p96 = scmp.ne.s32.totalorder %s81, %s95
      %p97 = scmp.eq.s32.totalorder %s29, 0
      %p98 = por %p96, %p97
      %s100 = sadd.s32 %s99, 1
      %p103 = scmp.eq.s32.totalorder %s23, 1
      %p104 = scmp.ne.s32.totalorder %s99, %s101
      %p105 = scmp.eq.s32.totalorder %s23, 0
      %p106 = por %p104, %p105
      %p107 = scmp.ne.s32.totalorder %s99, %s101
      %p108 = scmp.eq.s32.totalorder %s28, 1
      %p109 = por %p107, %p108
      %p110 = scmp.ne.s32.totalorder %s101, %s102
      %p111 = scmp.eq.s32.totalorder %s28, 0
      %p112 = por %p110, %p111
      %p113 = scmp.ne.s32.totalorder %s101, %s102
      %p114 = scmp.eq.s32.totalorder %s29, 1
      %p115 = por %p113, %p114
      %p117 = scmp.ne.s32.totalorder %s102, %s116
      %p118 = scmp.eq.s32.totalorder %s29, 0
      %p119 = por %p117, %p118
      %s120 = ssub.s32 %s23, %s30
      %p121 = scmp.eq.s32.totalorder %s120, 0
      %s123 = sadd.s32 %s122, 1
      %s124 = scalar_select %p121, %s122, %s123
      %p127 = pneg %p121
      %p128 = scmp.eq.s32.totalorder %s23, 1
      %p129 = por %p127, %p128
      %p130 = scmp.ne.s32.totalorder %s122, %s125
      %p131 = scmp.eq.s32.totalorder %s23, 0
      %p132 = por %p130, %p131
      %p133 = scmp.ne.s32.totalorder %s122, %s125
      %p134 = scmp.eq.s32.totalorder %s28, 1
      %p135 = por %p133, %p134
      %p136 = scmp.ne.s32.totalorder %s125, %s126
      %p137 = scmp.eq.s32.totalorder %s28, 0
      %p138 = por %p136, %p137
      %p139 = scmp.ne.s32.totalorder %s125, %s126
      %p140 = scmp.eq.s32.totalorder %s29, 1
      %p141 = por %p139, %p140
      %p143 = scmp.ne.s32.totalorder %s126, %s142
      %p144 = scmp.eq.s32.totalorder %s29, 0
      %p145 = por %p143, %p144
      %s146 = ssub.s32 %s23, %s30
      %p147 = scmp.eq.s32.totalorder %s146, 0
      %s149 = sadd.s32 %s148, 1
      %s150 = scalar_select %p147, %s148, %s149
      %p153 = pneg %p147
      %p154 = scmp.eq.s32.totalorder %s23, 1
      %p155 = por %p153, %p154
      %p156 = scmp.ne.s32.totalorder %s148, %s151
      %p157 = scmp.eq.s32.totalorder %s23, 0
      %p158 = por %p156, %p157
      %p159 = scmp.ne.s32.totalorder %s148, %s151
      %p160 = scmp.eq.s32.totalorder %s28, 1
      %p161 = por %p159, %p160
      %p162 = scmp.ne.s32.totalorder %s151, %s152
      %p163 = scmp.eq.s32.totalorder %s28, 0
      %p164 = por %p162, %p163
      %p165 = scmp.ne.s32.totalorder %s151, %s152
      %p166 = scmp.eq.s32.totalorder %s29, 1
      %p167 = por %p165, %p166
      %p169 = scmp.ne.s32.totalorder %s152, %s168
      %p170 = scmp.eq.s32.totalorder %s29, 0
      %p171 = por %p169, %p170
      %s172 = ssub.s32 %s23, %s30
      %p173 = scmp.eq.s32.totalorder %s172, 0
      %s175 = sadd.s32 %s174, 1
      %s176 = scalar_select %p173, %s174, %s175
      %p179 = pneg %p173
      %p180 = scmp.eq.s32.totalorder %s23, 1
      %p181 = por %p179, %p180
      %p182 = scmp.ne.s32.totalorder %s174, %s177
      %p183 = scmp.eq.s32.totalorder %s23, 0
      %p184 = por %p182, %p183
      %p185 = scmp.ne.s32.totalorder %s174, %s177
      %p186 = scmp.eq.s32.totalorder %s28, 1
      %p187 = por %p185, %p186
      %p188 = scmp.ne.s32.totalorder %s177, %s178
      %p189 = scmp.eq.s32.totalorder %s28, 0
      %p190 = por %p188, %p189
      %p191 = scmp.ne.s32.totalorder %s177, %s178
      %p192 = scmp.eq.s32.totalorder %s29, 1
      %p193 = por %p191, %p192
      %p195 = scmp.ne.s32.totalorder %s178, %s194
      %p196 = scmp.eq.s32.totalorder %s29, 0
      %p197 = por %p195, %p196
      %s198 = ssub.s32 %s23, %s30
      %p199 = scmp.eq.s32.totalorder %s198, 0
      %s201 = sadd.s32 %s200, 1
      %s202 = scalar_select %p199, %s200, %s201
      %p205 = pneg %p199
      %p206 = scmp.eq.s32.totalorder %s23, 1
      %p207 = por %p205, %p206
      %p208 = scmp.ne.s32.totalorder %s200, %s203
      %p209 = scmp.eq.s32.totalorder %s23, 0
      %p210 = por %p208, %p209
      %p211 = scmp.ne.s32.totalorder %s200, %s203
      %p212 = scmp.eq.s32.totalorder %s28, 1
      %p213 = por %p211, %p212
      %p214 = scmp.ne.s32.totalorder %s203, %s204
      %p215 = scmp.eq.s32.totalorder %s28, 0
      %p216 = por %p214, %p215
      %p217 = scmp.ne.s32.totalorder %s203, %s204
      %p218 = scmp.eq.s32.totalorder %s29, 1
      %p219 = por %p217, %p218
      %p221 = scmp.ne.s32.totalorder %s204, %s220
      %p222 = scmp.eq.s32.totalorder %s29, 0
      %p223 = por %p221, %p222
      %s224 = ssub.s32 %s23, %s30
      %p225 = scmp.eq.s32.totalorder %s224, 0
      %s227 = sadd.s32 %s226, 1
      %s228 = scalar_select %p225, %s226, %s227
      %p231 = pneg %p225
      %p232 = scmp.eq.s32.totalorder %s23, 1
      %p233 = por %p231, %p232
      %p234 = scmp.ne.s32.totalorder %s226, %s229
      %p235 = scmp.eq.s32.totalorder %s23, 0
      %p236 = por %p234, %p235
      %p237 = scmp.ne.s32.totalorder %s226, %s229
      %p238 = scmp.eq.s32.totalorder %s28, 1
      %p239 = por %p237, %p238
      %p240 = scmp.ne.s32.totalorder %s229, %s230
      %p241 = scmp.eq.s32.totalorder %s28, 0
      %p242 = por %p240, %p241
      %p243 = scmp.ne.s32.totalorder %s229, %s230
      %p244 = scmp.eq.s32.totalorder %s29, 1
      %p245 = por %p243, %p244
      %p247 = scmp.ne.s32.totalorder %s230, %s246
      %p248 = scmp.eq.s32.totalorder %s29, 0
      %p249 = por %p247, %p248
      %s250 = ssub.s32 %s23, %s30
      %p251 = scmp.eq.s32.totalorder %s250, 0
      %s253 = sadd.s32 %s252, 1
      %s254 = scalar_select %p251, %s252, %s253
      %p257 = pneg %p251
      %p258 = scmp.eq.s32.totalorder %s23, 1
      %p259 = por %p257, %p258
      %p260 = scmp.ne.s32.totalorder %s252, %s255
      %p261 = scmp.eq.s32.totalorder %s23, 0
      %p262 = por %p260, %p261
      %p263 = scmp.ne.s32.totalorder %s252, %s255
      %p264 = scmp.eq.s32.totalorder %s28, 1
      %p265 = por %p263, %p264
      %p266 = scmp.ne.s32.totalorder %s255, %s256
      %p267 = scmp.eq.s32.totalorder %s28, 0
      %p268 = por %p266, %p267
      %p269 = scmp.ne.s32.totalorder %s255, %s256
      %p270 = scmp.eq.s32.totalorder %s29, 1
      %p271 = por %p269, %p270
      %p273 = scmp.ne.s32.totalorder %s256, %s272
      %p274 = scmp.eq.s32.totalorder %s29, 0
      %p275 = por %p273, %p274
      %p276 = scmp.le.s32.totalorder 1, %s23
      %p277 = scmp.lt.s32.totalorder %s23, 3
      %p278 = pnand %p276, %p277
      %p279 = pneg %p278
      // Predicated region
      $region9: #{tpu_custom_call.1} parent=5 // pred_check
        _
      $region10: #{tpu_custom_call.1} parent=5 // pred_check_branch
        %281 = sbr.rel (%p278) target = $region12
      $region11: #{tpu_custom_call.1} parent=5 // pred_region
        %s282 = ssub.s32 %s23, 1
        // Predicated region
        $region13: #{tpu_custom_call.1} parent=11 // pred_check
          %p283 = pneg %p70
        $region14: #{tpu_custom_call.1} parent=11 // pred_check_branch
          %285 = sbr.rel (%p283) target = $region16
        $region15: #{tpu_custom_call.1} parent=11 // pred_region
          %s287 = ssub.s32 128, 128
          %288 = vsyncadd [#allocation6], %s287
          %s289 = sshll.u32 [#allocation5], 4
          %s290 = int_to_ptr.vmem [resolvable:$true] %s289
          %295 = dma.hbm_to_vmem [thread:$0]  %s1, 128, %s290, [#allocation6], 64, 64, 4
        $region16: #{tpu_custom_call.1} parent=11 // pred_fallthru
          _
        // Predicated region
        $region17: #{tpu_custom_call.1} parent=11 // pred_check
          %p296 = pneg %p91
        $region18: #{tpu_custom_call.1} parent=11 // pred_check_branch
          %298 = sbr.rel (%p296) target = $region20
        $region19: #{tpu_custom_call.1} parent=11 // pred_region
          %s300 = ssub.s32 128, 128
          %301 = vsyncadd [#allocation6], %s300
          %s302 = sshll.u32 [#allocation7], 4
          %s303 = int_to_ptr.vmem [resolvable:$true] %s302
          %308 = dma.hbm_to_vmem [thread:$0]  %s2, 128, %s303, [#allocation6], 64, 64, 4
        $region20: #{tpu_custom_call.1} parent=11 // pred_fallthru
          _
        // Predicated region
        $region21: #{tpu_custom_call.1} parent=11 // pred_check
          %p309 = pneg %p112
        $region22: #{tpu_custom_call.1} parent=11 // pred_check_branch
          %311 = sbr.rel (%p309) target = $region24
        $region23: #{tpu_custom_call.1} parent=11 // pred_region
          %s313 = ssub.s32 128, 128
          %314 = vsyncadd [#allocation9], %s313
          %s315 = sshll.u32 [#allocation8], 4
          %s316 = int_to_ptr.vmem [resolvable:$true] %s315
          %321 = dma.hbm_to_vmem [thread:$0]  %s3, 128, %s316, [#allocation9], 64, 64, 4
        $region24: #{tpu_custom_call.1} parent=11 // pred_fallthru
          _
      $region12: #{tpu_custom_call.1} parent=5 // pred_fallthru
        _
      %p322 = scmp.lt.s32.totalorder %s23, 2
      // Predicated region
      $region25: #{tpu_custom_call.1} parent=5 // pred_check
        %p323 = pneg %p322
      $region26: #{tpu_custom_call.1} parent=5 // pred_check_branch
        %325 = sbr.rel (%p323) target = $region28
      $region27: #{tpu_custom_call.1} parent=5 // pred_region
        // Predicated region
        $region29: #{tpu_custom_call.1} parent=27 // pred_check
          %p326 = pneg %p43
        $region30: #{tpu_custom_call.1} parent=27 // pred_check_branch
          %328 = sbr.rel (%p326) target = $region32
        $region31: #{tpu_custom_call.1} parent=27 // pred_region
          %s329 = sand.u32 %s23, 1
          %s330 = scalar_lea.sflag [#allocation3], %s329
          %s331 = sand.u32 %s33, 1
          %s332 = smul.addr %s331, 4
          %s333 = scalar_lea.vmem [#allocation2], %s332
          %s335 = ssub.s32 64, 64
          %336 = vsyncadd %s330, %s335
          %s337 = smul.addr %s23, 64
          %s338 = scalar_lea.hbm %s0, %s337
          %s340 = sshll.u32 %s333, 4
          %s341 = int_to_ptr.vmem [resolvable:$true] %s340
          %343 = dma.hbm_to_vmem [thread:$0]  %s338, 64, %s341, %s330
        $region32: #{tpu_custom_call.1} parent=27 // pred_fallthru
          _
        // Predicated region
        $region33: #{tpu_custom_call.1} parent=27 // pred_check
          %p344 = pneg %p132
        $region34: #{tpu_custom_call.1} parent=27 // pred_check_branch
          %346 = sbr.rel (%p344) target = $region36
        $region35: #{tpu_custom_call.1} parent=27 // pred_region
          %s347 = sand.u32 %s23, 1
          %s348 = scalar_lea.sflag [#allocation3], %s347
          %s349 = sand.u32 %s122, 1
          %s350 = smul.addr %s349, 32
          %s351 = scalar_lea.vmem [#allocation10], %s350
          %s353 = ssub.s32 512, 512
          %354 = vsyncadd %s348, %s353
          %s355 = smul.addr %s23, 4
          %s356 = smul.addr %s355, 128
          %s357 = scalar_lea.hbm %s4, %s356
          %s358 = sshll.u32 %s351, 4
          %s359 = int_to_ptr.vmem [resolvable:$true] %s358
          %364 = dma.hbm_to_vmem [thread:$0]  %s357, 512, %s359, %s348, 128, 128, 8
        $region36: #{tpu_custom_call.1} parent=27 // pred_fallthru
          _
        // Predicated region
        $region37: #{tpu_custom_call.1} parent=27 // pred_check
          %p365 = pneg %p158
        $region38: #{tpu_custom_call.1} parent=27 // pred_check_branch
          %367 = sbr.rel (%p365) target = $region40
        $region39: #{tpu_custom_call.1} parent=27 // pred_region
          %s368 = sand.u32 %s23, 1
          %s369 = scalar_lea.sflag [#allocation3], %s368
          %s370 = sand.u32 %s148, 1
          %s371 = smul.addr %s370, 32
          %s372 = scalar_lea.vmem [#allocation11], %s371
          %s374 = ssub.s32 512, 512
          %375 = vsyncadd %s369, %s374
          %s376 = smul.addr %s23, 4
          %s377 = smul.addr %s376, 128
          %s378 = scalar_lea.hbm %s5, %s377
          %s379 = sshll.u32 %s372, 4
          %s380 = int_to_ptr.vmem [resolvable:$true] %s379
          %385 = dma.hbm_to_vmem [thread:$0]  %s378, 512, %s380, %s369, 128, 128, 8
        $region40: #{tpu_custom_call.1} parent=27 // pred_fallthru
          _
        // Predicated region
        $region41: #{tpu_custom_call.1} parent=27 // pred_check
          %p386 = pneg %p184
        $region42: #{tpu_custom_call.1} parent=27 // pred_check_branch
          %388 = sbr.rel (%p386) target = $region44
        $region43: #{tpu_custom_call.1} parent=27 // pred_region
          %s389 = sand.u32 %s23, 1
          %s390 = scalar_lea.sflag [#allocation3], %s389
          %s391 = sand.u32 %s174, 1
          %s392 = smul.addr %s391, 2
          %s393 = scalar_lea.vmem [#allocation12], %s392
          %s395 = ssub.s32 32, 32
          %396 = vsyncadd %s390, %s395
          %s397 = smul.addr %s23, 32
          %s398 = scalar_lea.hbm %s6, %s397
          %s400 = sshll.u32 %s393, 4
          %s401 = int_to_ptr.vmem [resolvable:$true] %s400
          %403 = dma.hbm_to_vmem [thread:$0]  %s398, 32, %s401, %s390
        $region44: #{tpu_custom_call.1} parent=27 // pred_fallthru
          _
        // Predicated region
        $region45: #{tpu_custom_call.1} parent=27 // pred_check
          %p404 = pneg %p210
        $region46: #{tpu_custom_call.1} parent=27 // pred_check_branch
          %406 = sbr.rel (%p404) target = $region48
        $region47: #{tpu_custom_call.1} parent=27 // pred_region
          %s407 = sand.u32 %s23, 1
          %s408 = scalar_lea.sflag [#allocation3], %s407
          %s409 = sand.u32 %s200, 1
          %s410 = smul.addr %s409, 2
          %s411 = scalar_lea.vmem [#allocation13], %s410
          %s413 = ssub.s32 32, 32
          %414 = vsyncadd %s408, %s413
          %s415 = smul.addr %s23, 32
          %s416 = scalar_lea.hbm %s7, %s415
          %s418 = sshll.u32 %s411, 4
          %s419 = int_to_ptr.vmem [resolvable:$true] %s418
          %421 = dma.hbm_to_vmem [thread:$0]  %s416, 32, %s419, %s408
        $region48: #{tpu_custom_call.1} parent=27 // pred_fallthru
          _
        // Predicated region
        $region49: #{tpu_custom_call.1} parent=27 // pred_check
          %p422 = pneg %p236
        $region50: #{tpu_custom_call.1} parent=27 // pred_check_branch
          %424 = sbr.rel (%p422) target = $region52
        $region51: #{tpu_custom_call.1} parent=27 // pred_region
          %s425 = sand.u32 %s23, 1
          %s426 = scalar_lea.sflag [#allocation3], %s425
          %s427 = sand.u32 %s226, 1
          %s428 = smul.addr %s427, 32
          %s429 = scalar_lea.vmem [#allocation14], %s428
          %s431 = ssub.s32 512, 512
          %432 = vsyncadd %s426, %s431
          %s433 = smul.addr %s23, 4
          %s434 = smul.addr %s433, 128
          %s435 = scalar_lea.hbm %s8, %s434
          %s436 = sshll.u32 %s429, 4
          %s437 = int_to_ptr.vmem [resolvable:$true] %s436
          %442 = dma.hbm_to_vmem [thread:$0]  %s435, 512, %s437, %s426, 128, 128, 8
        $region52: #{tpu_custom_call.1} parent=27 // pred_fallthru
          _
      $region28: #{tpu_custom_call.1} parent=5 // pred_fallthru
        _
      %p443 = scmp.le.s32.totalorder 1, %s23
      %p444 = scmp.lt.s32.totalorder %s23, 3
      %p445 = pnand %p443, %p444
      %p446 = pneg %p445
      // Predicated region
      $region53: #{tpu_custom_call.1} parent=5 // pred_check
        _
      $region54: #{tpu_custom_call.1} parent=5 // pred_check_branch
        %448 = sbr.rel (%p445) target = $region56
      $region55: #{tpu_custom_call.1} parent=5 // pred_region
        %s449 = ssub.s32 %s23, 1
        %s450 = sand.u32 %s28, 1
        %s451 = scalar_lea.sflag [#allocation3], %s450
        %s452 = sand.u32 %s36, 1
        %s453 = smul.addr %s452, 4
        %s454 = scalar_lea.vmem [#allocation2], %s453
        // Predicated region
        $region57: #{tpu_custom_call.1} parent=55 // pred_check
          %p455 = pneg %p49
        $region58: #{tpu_custom_call.1} parent=55 // pred_check_branch
          %457 = sbr.rel (%p455) target = $region60
        $region59: #{tpu_custom_call.1} parent=55 // pred_region
          %458 = dma.done %s451, 64
        $region60: #{tpu_custom_call.1} parent=55 // pred_fallthru
          _
        // Predicated region
        $region61: #{tpu_custom_call.1} parent=55 // pred_check
          %p459 = pneg %p70
        $region62: #{tpu_custom_call.1} parent=55 // pred_check_branch
          %461 = sbr.rel (%p459) target = $region64
        $region63: #{tpu_custom_call.1} parent=55 // pred_region
          %462 = dma.done [#allocation6], 128
        $region64: #{tpu_custom_call.1} parent=55 // pred_fallthru
          _
        // Predicated region
        $region65: #{tpu_custom_call.1} parent=55 // pred_check
          %p463 = pneg %p91
        $region66: #{tpu_custom_call.1} parent=55 // pred_check_branch
          %465 = sbr.rel (%p463) target = $region68
        $region67: #{tpu_custom_call.1} parent=55 // pred_region
          %466 = dma.done [#allocation6], 128
        $region68: #{tpu_custom_call.1} parent=55 // pred_fallthru
          _
        // Predicated region
        $region69: #{tpu_custom_call.1} parent=55 // pred_check
          %p467 = pneg %p112
        $region70: #{tpu_custom_call.1} parent=55 // pred_check_branch
          %469 = sbr.rel (%p467) target = $region72
        $region71: #{tpu_custom_call.1} parent=55 // pred_region
          %470 = dma.done [#allocation9], 128
        $region72: #{tpu_custom_call.1} parent=55 // pred_fallthru
          _
        %s471 = sand.u32 %s28, 1
        %s472 = scalar_lea.sflag [#allocation3], %s471
        %s473 = sand.u32 %s125, 1
        %s474 = smul.addr %s473, 32
        %s475 = scalar_lea.vmem [#allocation10], %s474
        // Predicated region
        $region73: #{tpu_custom_call.1} parent=55 // pred_check
          %p476 = pneg %p138
        $region74: #{tpu_custom_call.1} parent=55 // pred_check_branch
          %478 = sbr.rel (%p476) target = $region76
        $region75: #{tpu_custom_call.1} parent=55 // pred_region
          %479 = dma.done %s472, 512
        $region76: #{tpu_custom_call.1} parent=55 // pred_fallthru
          _
        %s480 = sand.u32 %s28, 1
        %s481 = scalar_lea.sflag [#allocation3], %s480
        %s482 = sand.u32 %s151, 1
        %s483 = smul.addr %s482, 32
        %s484 = scalar_lea.vmem [#allocation11], %s483
        // Predicated region
        $region77: #{tpu_custom_call.1} parent=55 // pred_check
          %p485 = pneg %p164
        $region78: #{tpu_custom_call.1} parent=55 // pred_check_branch
          %487 = sbr.rel (%p485) target = $region80
        $region79: #{tpu_custom_call.1} parent=55 // pred_region
          %488 = dma.done %s481, 512
        $region80: #{tpu_custom_call.1} parent=55 // pred_fallthru
          _
        %s489 = sand.u32 %s28, 1
        %s490 = scalar_lea.sflag [#allocation3], %s489
        %s491 = sand.u32 %s177, 1
        %s492 = smul.addr %s491, 2
        %s493 = scalar_lea.vmem [#allocation12], %s492
        // Predicated region
        $region81: #{tpu_custom_call.1} parent=55 // pred_check
          %p494 = pneg %p190
        $region82: #{tpu_custom_call.1} parent=55 // pred_check_branch
          %496 = sbr.rel (%p494) target = $region84
        $region83: #{tpu_custom_call.1} parent=55 // pred_region
          %497 = dma.done %s490, 32
        $region84: #{tpu_custom_call.1} parent=55 // pred_fallthru
          _
        %s498 = sand.u32 %s28, 1
        %s499 = scalar_lea.sflag [#allocation3], %s498
        %s500 = sand.u32 %s203, 1
        %s501 = smul.addr %s500, 2
        %s502 = scalar_lea.vmem [#allocation13], %s501
        // Predicated region
        $region85: #{tpu_custom_call.1} parent=55 // pred_check
          %p503 = pneg %p216
        $region86: #{tpu_custom_call.1} parent=55 // pred_check_branch
          %505 = sbr.rel (%p503) target = $region88
        $region87: #{tpu_custom_call.1} parent=55 // pred_region
          %506 = dma.done %s499, 32
        $region88: #{tpu_custom_call.1} parent=55 // pred_fallthru
          _
        %s507 = sand.u32 %s28, 1
        %s508 = scalar_lea.sflag [#allocation3], %s507
        %s509 = sand.u32 %s229, 1
        %s510 = smul.addr %s509, 32
        %s511 = scalar_lea.vmem [#allocation14], %s510
        // Predicated region
        $region89: #{tpu_custom_call.1} parent=55 // pred_check
          %p512 = pneg %p242
        $region90: #{tpu_custom_call.1} parent=55 // pred_check_branch
          %514 = sbr.rel (%p512) target = $region92
        $region91: #{tpu_custom_call.1} parent=55 // pred_region
          %515 = dma.done %s508, 512
        $region92: #{tpu_custom_call.1} parent=55 // pred_fallthru
          _
        %s516 = sand.u32 %s28, 1
        %s517 = scalar_lea.sflag [#allocation3], %s516
        %s518 = sand.u32 %s36, 1
        %s519 = smul.addr %s518, 4
        %s520 = scalar_lea.vmem [#allocation2], %s519
        %p521 = pneg %p49
        %p522 = pneg %p46
        %p523 = pneg %p70
        %p524 = pneg %p67
        %p525 = pneg %p91
        %p526 = pneg %p88
        %p527 = pneg %p112
        %p528 = pneg %p109
        %s529 = sand.u32 %s28, 1
        %s530 = scalar_lea.sflag [#allocation3], %s529
        %s531 = sand.u32 %s125, 1
        %s532 = smul.addr %s531, 32
        %s533 = scalar_lea.vmem [#allocation10], %s532
        %p534 = pneg %p138
        %p535 = pneg %p135
        %s536 = sand.u32 %s28, 1
        %s537 = scalar_lea.sflag [#allocation3], %s536
        %s538 = sand.u32 %s151, 1
        %s539 = smul.addr %s538, 32
        %s540 = scalar_lea.vmem [#allocation11], %s539
        %p541 = pneg %p164
        %p542 = pneg %p161
        %s543 = sand.u32 %s28, 1
        %s544 = scalar_lea.sflag [#allocation3], %s543
        %s545 = sand.u32 %s177, 1
        %s546 = smul.addr %s545, 2
        %s547 = scalar_lea.vmem [#allocation12], %s546
        %p548 = pneg %p190
        %p549 = pneg %p187
        %s550 = sand.u32 %s28, 1
        %s551 = scalar_lea.sflag [#allocation3], %s550
        %s552 = sand.u32 %s203, 1
        %s553 = smul.addr %s552, 2
        %s554 = scalar_lea.vmem [#allocation13], %s553
        %p555 = pneg %p216
        %p556 = pneg %p213
        %s557 = sand.u32 %s28, 1
        %s558 = scalar_lea.sflag [#allocation3], %s557
        %s559 = sand.u32 %s229, 1
        %s560 = smul.addr %s559, 32
        %s561 = scalar_lea.vmem [#allocation14], %s560
        %p562 = pneg %p242
        %p563 = pneg %p239
        %p564 = pneg %p268
        %p565 = pneg %p265
        %s566 = sand.u32 %s255, 1
        %s567 = scalar_lea.sflag [#allocation4], %s566
        %s568 = sand.u32 %s255, 1
        %s569 = smul.addr %s568, 64
        %s570 = scalar_lea.vmem [#allocation15], %s569
        %v572 = vld [vmem:[%s475] sm:$0xff]
        %v573 = vld [vmem:[%s475 + $0x8] sm:$0xff]
        %v574 = vld [vmem:[%s475 + $0x10] sm:$0xff]
        %v575 = vld [vmem:[%s475 + $0x18] sm:$0xff]
        %v576 = vld [vmem:[%s484] sm:$0xff]
        %v577 = vld [vmem:[%s484 + $0x8] sm:$0xff]
        %v578 = vld [vmem:[%s484 + $0x10] sm:$0xff]
        %v579 = vld [vmem:[%s484 + $0x18] sm:$0xff]
        %v580 = vld [vmem:[%s511] sm:$0xff]
        %v581 = vld [vmem:[%s511 + $0x8] sm:$0xff]
        %v582 = vld [vmem:[%s511 + $0x10] sm:$0xff]
        %v583 = vld [vmem:[%s511 + $0x18] sm:$0xff]
        %v584 = vld [vmem:[%s493] sm:$0x3]
        %v585 = vld [vmem:[%s502] sm:$0x3]
        %v586 = vcvt.s32.f32 %v572
        %v587 = vcvt.s32.f32 %v573
        %v588 = vcvt.s32.f32 %v574
        %v589 = vcvt.s32.f32 %v575
        %v590 = vcvt.s32.f32 %v576
        %v591 = vcvt.s32.f32 %v577
        %v592 = vcvt.s32.f32 %v578
        %v593 = vcvt.s32.f32 %v579
        %595 = vset.pattern.permute.xlu0 0
        %596 = vperm.xlu0 %595, %v586
        %v597 = vpop.permute.xlu0 %596
        %600 = vset.pattern.permute.xlu0 0
        %601 = vperm.xlu0 %600, %v587
        %v602 = vpop.permute.xlu0 %601
        %605 = vset.pattern.permute.xlu0 0
        %606 = vperm.xlu0 %605, %v588
        %v607 = vpop.permute.xlu0 %606
        %610 = vset.pattern.permute.xlu0 0
        %611 = vperm.xlu0 %610, %v589
        %v612 = vpop.permute.xlu0 %611
        %v614 = vlaneseq
        %v615 = vshrl.u32 %v614, 7
        %v616 = vsub.s32 0, %v615
        %v617 = vrot.slane %v584, %v616
        %v618 = vsub.f32 %v597, %v617
        %v619 = vsub.f32 %v602, %v617
        %v620 = vsub.f32 %v607, %v617
        %v621 = vsub.f32 %v612, %v617
        %v622 = vmul.f32 %v618, %v618
        %v623 = vmul.f32 %v619, %v619
        %v624 = vmul.f32 %v620, %v620
        %v625 = vmul.f32 %v621, %v621
        %v626 = vadd.f32 %v585, 1e-07
        %v627 = vlaneseq
        %v628 = vshrl.u32 %v627, 7
        %v629 = vsub.s32 0, %v628
        %v630 = vrot.slane %v626, %v629
        %v631 = vrcp.pop %v630
        %v632 = vmul.f32 %v622, %v631
        %v633 = vmul.f32 %v623, %v631
        %v634 = vmul.f32 %v624, %v631
        %v635 = vmul.f32 %v625, %v631
        %637 = vset.pattern.permute.xlu0 0
        %638 = vperm.xlu0 %637, %v590
        %v639 = vpop.permute.xlu0 %638
        %642 = vset.pattern.permute.xlu0 0
        %643 = vperm.xlu0 %642, %v591
        %v644 = vpop.permute.xlu0 %643
        %647 = vset.pattern.permute.xlu0 0
        %648 = vperm.xlu0 %647, %v592
        %v649 = vpop.permute.xlu0 %648
        %652 = vset.pattern.permute.xlu0 0
        %653 = vperm.xlu0 %652, %v593
        %v654 = vpop.permute.xlu0 %653
        %v656 = vlaneseq
        %v657 = vshrl.u32 %v656, 7
        %v658 = vsub.s32 1, %v657
        %v659 = vrot.slane %v584, %v658
        %v660 = vsub.f32 %v639, %v659
        %v661 = vsub.f32 %v644, %v659
        %v662 = vsub.f32 %v649, %v659
        %v663 = vsub.f32 %v654, %v659
        %v664 = vmul.f32 %v660, %v660
        %v665 = vmul.f32 %v661, %v661
        %v666 = vmul.f32 %v662, %v662
        %v667 = vmul.f32 %v663, %v663
        %v668 = vlaneseq
        %v669 = vshrl.u32 %v668, 7
        %v670 = vsub.s32 1, %v669
        %v671 = vrot.slane %v626, %v670
        %v672 = vrcp.pop %v671
        %v673 = vmul.f32 %v664, %v672
        %v674 = vmul.f32 %v665, %v672
        %v675 = vmul.f32 %v666, %v672
        %v676 = vmul.f32 %v667, %v672
        %v677 = vadd.f32 %v632, %v673
        %v678 = vadd.f32 %v633, %v674
        %v679 = vadd.f32 %v634, %v675
        %v680 = vadd.f32 %v635, %v676
        %v681 = vmul.f32 %v677, -0.5
        %v682 = vmul.f32 %v678, -0.5
        %v683 = vmul.f32 %v679, -0.5
        %v684 = vmul.f32 %v680, -0.5
        %v685 = vmul.f32 %v681, 1.442695
        %v686 = vpow.pop %v685
        %v687 = vmul.f32 %v682, 1.442695
        %v688 = vpow.pop %v687
        %v689 = vmul.f32 %v683, 1.442695
        %v690 = vpow.pop %v689
        %v691 = vmul.f32 %v684, 1.442695
        %v692 = vpow.pop %v691
        %v693 = vsub.f32 1.0, %v580
        %v694 = vsub.f32 1.0, %v581
        %v695 = vsub.f32 1.0, %v582
        %v696 = vsub.f32 1.0, %v583
        %698 = vset.pattern.permute.xlu0 0
        %699 = vperm.xlu0 %698, %v693
        %v700 = vpop.permute.xlu0 %699
        %703 = vset.pattern.permute.xlu0 0
        %704 = vperm.xlu0 %703, %v694
        %v705 = vpop.permute.xlu0 %704
        %708 = vset.pattern.permute.xlu0 0
        %709 = vperm.xlu0 %708, %v695
        %v710 = vpop.permute.xlu0 %709
        %713 = vset.pattern.permute.xlu0 0
        %714 = vperm.xlu0 %713, %v696
        %v715 = vpop.permute.xlu0 %714
        %v717 = vmul.f32 %v686, %v700
        %v718 = vmul.f32 %v688, %v705
        %v719 = vmul.f32 %v690, %v710
        %v720 = vmul.f32 %v692, %v715
        %vm721 = vcmask 31744
        %v722 = vsel %vm721, %v717, 0.0
        %v723 = vsel %vm721, %v718, 0.0
        %v724 = vadd.f32 %v722, %v723
        %v725 = vsel %vm721, %v719, 0.0
        %v726 = vadd.f32 %v724, %v725
        %v727 = vsel %vm721, %v720, 0.0
        %v728 = vadd.f32 %v726, %v727
        %v729 = vrot.slane %v728, 4
        %v730 = vadd.f32 %v728, %v729
        %v731 = vrot.slane %v730, 2
        %v732 = vadd.f32 %v730, %v731
        %v733 = vrot.slane %v732, 1
        %v734 = vadd.f32 %v732, %v733
        %v735 = vadd.f32 %v734, 1e-07
        %v736 = vrcp.pop %v735
        %v737 = vmul.f32 %v717, %v736
        %v738 = vmul.f32 %v718, %v736
        %v739 = vmul.f32 %v719, %v736
        %v740 = vmul.f32 %v720, %v736
        %v741 = vsel %vm721, %v737, 0.0
        %742 = vadd.xlane.f32.xlu0 %v741
        %v743 = vpop.xlane.xlu0 %742
        %v744 = vsel %vm721, %v738, 0.0
        %745 = vadd.xlane.f32.xlu0 %v744
        %v746 = vpop.xlane.xlu0 %745
        %v747 = vsel %vm721, %v739, 0.0
        %748 = vadd.xlane.f32.xlu0 %v747
        %v749 = vpop.xlane.xlu0 %748
        %v750 = vsel %vm721, %v740, 0.0
        %751 = vadd.xlane.f32.xlu0 %v750
        %v752 = vpop.xlane.xlu0 %751
        %v753 = vld [vmem:[%s454] sm:$0xf]
        %v754 = vld [vmem:[#allocation5] sm:$0xf]
        %v755 = vld [vmem:[#allocation5 + $0x4] sm:$0xf]
        %v758 = vunpack.c.l.b16 %v754
        %v759 = vunpack.c.l.b16 %v755
        %v760 = vpack.c.b16 %v759, %v758
        %vm762 = vcmask 130048
        %v764 = vsel %vm762, %v753, 0
        %766 = vmatprep.subr.bf16.mxu0 0
        %767 = vmatpush1.bf16.msra.mxu0 %v760
        %768 = vmatprep.subr.bf16.mxu0 0
        %769 = vmatpush1.bf16.msra.mxu0 0
        %770 = vmatprep.subr.bf16.mxu0 0
        %771 = vmatpush1.bf16.msra.mxu0 0
        %772 = vmatprep.subr.bf16.mxu0 0
        %773 = vmatpush1.bf16.msra.mxu0 0
        %774 = vmatprep.subr.bf16.mxu0 0
        %775 = vmatpush1.bf16.msra.mxu0 0
        %776 = vmatprep.subr.bf16.mxu0 0
        %777 = vmatpush1.bf16.msra.mxu0 0
        %778 = vmatprep.subr.bf16.mxu0 0
        %779 = vmatpush1.bf16.msra.mxu0 0
        %780 = vmatprep.subr.bf16.mxu0 0
        %781 = vmatpush1.bf16.msra.mxu0 0
        %782 = vmatprep.subr.bf16.mxu0 0
        %783 = vmatpush1.bf16.msra.mxu0 0
        %784 = vmatprep.subr.bf16.mxu0 0
        %785 = vmatpush1.bf16.msra.mxu0 0
        %786 = vmatprep.subr.bf16.mxu0 0
        %787 = vmatpush1.bf16.msra.mxu0 0
        %788 = vmatprep.subr.bf16.mxu0 0
        %789 = vmatpush1.bf16.msra.mxu0 0
        %790 = vmatprep.subr.bf16.mxu0 0
        %791 = vmatpush1.bf16.msra.mxu0 0
        %792 = vmatprep.subr.bf16.mxu0 0
        %793 = vmatpush1.bf16.msra.mxu0 0
        %794 = vmatprep.subr.bf16.mxu0 0
        %795 = vmatpush1.bf16.msra.mxu0 0
        %796 = vmatprep.subr.bf16.mxu0 0
        %797 = vmatpush1.bf16.msra.mxu0 0
        %798 = vmatprep.mubr.bf16.mxu0 0
        %799 = vmatmul.mubr.bf16.gmra.mrb[0].mxu0 %v764
        %v800 = vpop.f32.mrb[0].mxu0
        %v801 = vadd.f32 0.0, %v800
        %v802 = vpop.f32.mrb[0].mxu0
        %v803 = vpop.f32.mrb[0].mxu0
        %v804 = vpop.f32.mrb[0].mxu0
        %805 = vdwg.mxu0
        %v806 = vpack.c.bf16 %v801, %v801
        %v807 = vld [vmem:[#allocation7] sm:$0xf]
        %v808 = vld [vmem:[#allocation7 + $0x4] sm:$0xf]
        %v811 = vunpack.c.l.b16 %v807
        %v812 = vunpack.c.l.b16 %v808
        %v813 = vpack.c.b16 %v812, %v811
        %815 = vmatprep.subr.bf16.mxu0 0
        %816 = vmatpush1.bf16.msra.mxu0 %v813
        %817 = vmatprep.subr.bf16.mxu0 0
        %818 = vmatpush1.bf16.msra.mxu0 0
        %819 = vmatprep.subr.bf16.mxu0 0
        %820 = vmatpush1.bf16.msra.mxu0 0
        %821 = vmatprep.subr.bf16.mxu0 0
        %822 = vmatpush1.bf16.msra.mxu0 0
        %823 = vmatprep.subr.bf16.mxu0 0
        %824 = vmatpush1.bf16.msra.mxu0 0
        %825 = vmatprep.subr.bf16.mxu0 0
        %826 = vmatpush1.bf16.msra.mxu0 0
        %827 = vmatprep.subr.bf16.mxu0 0
        %828 = vmatpush1.bf16.msra.mxu0 0
        %829 = vmatprep.subr.bf16.mxu0 0
        %830 = vmatpush1.bf16.msra.mxu0 0
        %831 = vmatprep.subr.bf16.mxu0 0
        %832 = vmatpush1.bf16.msra.mxu0 0
        %833 = vmatprep.subr.bf16.mxu0 0
        %834 = vmatpush1.bf16.msra.mxu0 0
        %835 = vmatprep.subr.bf16.mxu0 0
        %836 = vmatpush1.bf16.msra.mxu0 0
        %837 = vmatprep.subr.bf16.mxu0 0
        %838 = vmatpush1.bf16.msra.mxu0 0
        %839 = vmatprep.subr.bf16.mxu0 0
        %840 = vmatpush1.bf16.msra.mxu0 0
        %841 = vmatprep.subr.bf16.mxu0 0
        %842 = vmatpush1.bf16.msra.mxu0 0
        %843 = vmatprep.subr.bf16.mxu0 0
        %844 = vmatpush1.bf16.msra.mxu0 0
        %845 = vmatprep.subr.bf16.mxu0 0
        %846 = vmatpush1.bf16.msra.mxu0 0
        %847 = vmatprep.mubr.bf16.mxu0 0
        %848 = vmatmul.mubr.bf16.gmra.mrb[0].mxu0 %v764
        %v849 = vpop.f32.mrb[0].mxu0
        %v850 = vadd.f32 0.0, %v849
        %v851 = vpop.f32.mrb[0].mxu0
        %v852 = vpop.f32.mrb[0].mxu0
        %v853 = vpop.f32.mrb[0].mxu0
        %854 = vdwg.mxu0
        %v855 = vpack.c.bf16 %v850, %v850
        %v856 = vld [vmem:[#allocation8] sm:$0xf]
        %v857 = vld [vmem:[#allocation8 + $0x4] sm:$0xf]
        %v860 = vunpack.c.l.b16 %v856
        %v861 = vunpack.c.l.b16 %v857
        %v862 = vpack.c.b16 %v861, %v860
        %864 = vmatprep.subr.bf16.mxu0 0
        %865 = vmatpush1.bf16.msra.mxu0 %v862
        %866 = vmatprep.subr.bf16.mxu0 0
        %867 = vmatpush1.bf16.msra.mxu0 0
        %868 = vmatprep.subr.bf16.mxu0 0
        %869 = vmatpush1.bf16.msra.mxu0 0
        %870 = vmatprep.subr.bf16.mxu0 0
        %871 = vmatpush1.bf16.msra.mxu0 0
        %872 = vmatprep.subr.bf16.mxu0 0
        %873 = vmatpush1.bf16.msra.mxu0 0
        %874 = vmatprep.subr.bf16.mxu0 0
        %875 = vmatpush1.bf16.msra.mxu0 0
        %876 = vmatprep.subr.bf16.mxu0 0
        %877 = vmatpush1.bf16.msra.mxu0 0
        %878 = vmatprep.subr.bf16.mxu0 0
        %879 = vmatpush1.bf16.msra.mxu0 0
        %880 = vmatprep.subr.bf16.mxu0 0
        %881 = vmatpush1.bf16.msra.mxu0 0
        %882 = vmatprep.subr.bf16.mxu0 0
        %883 = vmatpush1.bf16.msra.mxu0 0
        %884 = vmatprep.subr.bf16.mxu0 0
        %885 = vmatpush1.bf16.msra.mxu0 0
        %886 = vmatprep.subr.bf16.mxu0 0
        %887 = vmatpush1.bf16.msra.mxu0 0
        %888 = vmatprep.subr.bf16.mxu0 0
        %889 = vmatpush1.bf16.msra.mxu0 0
        %890 = vmatprep.subr.bf16.mxu0 0
        %891 = vmatpush1.bf16.msra.mxu0 0
        %892 = vmatprep.subr.bf16.mxu0 0
        %893 = vmatpush1.bf16.msra.mxu0 0
        %894 = vmatprep.subr.bf16.mxu0 0
        %895 = vmatpush1.bf16.msra.mxu0 0
        %896 = vmatprep.mubr.bf16.mxu0 0
        %897 = vmatmul.mubr.bf16.gmra.mrb[0].mxu0 %v764
        %v898 = vpop.f32.mrb[0].mxu0
        %v899 = vadd.f32 0.0, %v898
        %v900 = vpop.f32.mrb[0].mxu0
        %v901 = vpop.f32.mrb[0].mxu0
        %v902 = vpop.f32.mrb[0].mxu0
        %903 = vdwg.mxu0
        %v904 = vpack.c.bf16 %v899, %v899
        %v905 = vlaneseq
        %v906 = vand.u32 %v905, 127
        %907 = vset.pattern.permute.xlu0 0
        %908 = vperm.xlu0 %907, %v572
        %v909 = vpop.permute.xlu0 %908
        %910 = vset.pattern.permute.xlu0 0
        %911 = vperm.xlu0 %910, %v573
        %v912 = vpop.permute.xlu0 %911
        %913 = vset.pattern.permute.xlu0 0
        %914 = vperm.xlu0 %913, %v574
        %v915 = vpop.permute.xlu0 %914
        %916 = vset.pattern.permute.xlu0 0
        %917 = vperm.xlu0 %916, %v575
        %v918 = vpop.permute.xlu0 %917
        %vm919 = vcmp.eq.s32.totalorder %v909, %v906
        %vm920 = vcmp.eq.s32.totalorder %v912, %v906
        %vm921 = vcmp.eq.s32.totalorder %v915, %v906
        %vm922 = vcmp.eq.s32.totalorder %v918, %v906
        %923 = vset.pattern.permute.xlu0 0
        %924 = vperm.xlu0 %923, %v576
        %v925 = vpop.permute.xlu0 %924
        %926 = vset.pattern.permute.xlu0 0
        %927 = vperm.xlu0 %926, %v577
        %v928 = vpop.permute.xlu0 %927
        %929 = vset.pattern.permute.xlu0 0
        %930 = vperm.xlu0 %929, %v578
        %v931 = vpop.permute.xlu0 %930
        %932 = vset.pattern.permute.xlu0 0
        %933 = vperm.xlu0 %932, %v579
        %v934 = vpop.permute.xlu0 %933
        %vm935 = vcmp.eq.s32.totalorder %v925, %v906
        %vm936 = vcmp.eq.s32.totalorder %v928, %v906
        %vm937 = vcmp.eq.s32.totalorder %v931, %v906
        %vm938 = vcmp.eq.s32.totalorder %v934, %v906
        %v939 = vsel %vm919, 1, 0
        %v940 = vsel %vm920, 1, 0
        %v941 = vsel %vm921, 1, 0
        %v942 = vsel %vm922, 1, 0
        %v943 = vcvt.s32.f32 %v939
        %v944 = vcvt.s32.f32 %v940
        %v945 = vcvt.s32.f32 %v941
        %v946 = vcvt.s32.f32 %v942
        %v947 = vpack.c.bf16 %v944, %v943
        %v948 = vpack.c.bf16 %v946, %v945
        %v949 = vsel %vm935, 1, 0
        %v950 = vsel %vm936, 1, 0
        %v951 = vsel %vm937, 1, 0
        %v952 = vsel %vm938, 1, 0
        %v953 = vcvt.s32.f32 %v949
        %v954 = vcvt.s32.f32 %v950
        %v955 = vcvt.s32.f32 %v951
        %v956 = vcvt.s32.f32 %v952
        %v957 = vpack.c.bf16 %v954, %v953
        %v958 = vpack.c.bf16 %v956, %v955
        %vm959 = vcmask 64512
        %v961 = vsel %vm959, %v947, 0
        %v964 = vsel %vm959, %v948, 0
        %vm966 = vcmask 1043456
        %v968 = vsel %vm966, %v806, 0
        %970 = vmatprep.subr.bf16.mxu0 0
        %971 = vmatpush1.bf16.msra.mxu0 %v968
        %972 = vmatprep.subr.bf16.mxu0 0
        %973 = vmatpush1.bf16.msra.mxu0 0
        %974 = vmatprep.subr.bf16.mxu0 0
        %975 = vmatpush1.bf16.msra.mxu0 0
        %976 = vmatprep.subr.bf16.mxu0 0
        %977 = vmatpush1.bf16.msra.mxu0 0
        %978 = vmatprep.subr.bf16.mxu0 0
        %979 = vmatpush1.bf16.msra.mxu0 0
        %980 = vmatprep.subr.bf16.mxu0 0
        %981 = vmatpush1.bf16.msra.mxu0 0
        %982 = vmatprep.subr.bf16.mxu0 0
        %983 = vmatpush1.bf16.msra.mxu0 0
        %984 = vmatprep.subr.bf16.mxu0 0
        %985 = vmatpush1.bf16.msra.mxu0 0
        %986 = vmatprep.subr.bf16.mxu0 0
        %987 = vmatpush1.bf16.msra.mxu0 0
        %988 = vmatprep.subr.bf16.mxu0 0
        %989 = vmatpush1.bf16.msra.mxu0 0
        %990 = vmatprep.subr.bf16.mxu0 0
        %991 = vmatpush1.bf16.msra.mxu0 0
        %992 = vmatprep.subr.bf16.mxu0 0
        %993 = vmatpush1.bf16.msra.mxu0 0
        %994 = vmatprep.subr.bf16.mxu0 0
        %995 = vmatpush1.bf16.msra.mxu0 0
        %996 = vmatprep.subr.bf16.mxu0 0
        %997 = vmatpush1.bf16.msra.mxu0 0
        %998 = vmatprep.subr.bf16.mxu0 0
        %999 = vmatpush1.bf16.msra.mxu0 0
        %1000 = vmatprep.subr.bf16.mxu0 0
        %1001 = vmatpush1.bf16.msra.mxu0 0
        %1002 = vmatprep.mubr.bf16.mxu0 0
        %1003 = vmatmul.mubr.bf16.gmra.mrb[0].mxu0 %v961
        %v1004 = vpop.f32.mrb[0].mxu0
        %v1005 = vadd.f32 0.0, %v1004
        %v1006 = vpop.f32.mrb[0].mxu0
        %v1007 = vpop.f32.mrb[0].mxu0
        %v1008 = vadd.f32 0.0, %v1007
        %v1009 = vpop.f32.mrb[0].mxu0
        %1010 = vmatprep.mubr.bf16.mxu0 0
        %1011 = vmatmul.mubr.bf16.gmra.mrb[0].mxu0 %v964
        %v1012 = vpop.f32.mrb[0].mxu0
        %v1013 = vadd.f32 0.0, %v1012
        %v1014 = vpop.f32.mrb[0].mxu0
        %v1015 = vpop.f32.mrb[0].mxu0
        %v1016 = vadd.f32 0.0, %v1015
        %v1017 = vpop.f32.mrb[0].mxu0
        %1018 = vdwg.mxu0
        %v1020 = vsel %vm959, %v957, 0
        %v1023 = vsel %vm959, %v958, 0
        %v1026 = vsel %vm966, %v855, 0
        %1028 = vmatprep.subr.bf16.mxu0 0
        %1029 = vmatpush1.bf16.msra.mxu0 %v1026
        %1030 = vmatprep.subr.bf16.mxu0 0
        %1031 = vmatpush1.bf16.msra.mxu0 0
        %1032 = vmatprep.subr.bf16.mxu0 0
        %1033 = vmatpush1.bf16.msra.mxu0 0
        %1034 = vmatprep.subr.bf16.mxu0 0
        %1035 = vmatpush1.bf16.msra.mxu0 0
        %1036 = vmatprep.subr.bf16.mxu0 0
        %1037 = vmatpush1.bf16.msra.mxu0 0
        %1038 = vmatprep.subr.bf16.mxu0 0
        %1039 = vmatpush1.bf16.msra.mxu0 0
        %1040 = vmatprep.subr.bf16.mxu0 0
        %1041 = vmatpush1.bf16.msra.mxu0 0
        %1042 = vmatprep.subr.bf16.mxu0 0
        %1043 = vmatpush1.bf16.msra.mxu0 0
        %1044 = vmatprep.subr.bf16.mxu0 0
        %1045 = vmatpush1.bf16.msra.mxu0 0
        %1046 = vmatprep.subr.bf16.mxu0 0
        %1047 = vmatpush1.bf16.msra.mxu0 0
        %1048 = vmatprep.subr.bf16.mxu0 0
        %1049 = vmatpush1.bf16.msra.mxu0 0
        %1050 = vmatprep.subr.bf16.mxu0 0
        %1051 = vmatpush1.bf16.msra.mxu0 0
        %1052 = vmatprep.subr.bf16.mxu0 0
        %1053 = vmatpush1.bf16.msra.mxu0 0
        %1054 = vmatprep.subr.bf16.mxu0 0
        %1055 = vmatpush1.bf16.msra.mxu0 0
        %1056 = vmatprep.subr.bf16.mxu0 0
        %1057 = vmatpush1.bf16.msra.mxu0 0
        %1058 = vmatprep.subr.bf16.mxu0 0
        %1059 = vmatpush1.bf16.msra.mxu0 0
        %1060 = vmatprep.mubr.bf16.mxu0 0
        %1061 = vmatmul.mubr.bf16.gmra.mrb[0].mxu0 %v1020
        %v1062 = vpop.f32.mrb[0].mxu0
        %v1063 = vadd.f32 0.0, %v1062
        %v1064 = vpop.f32.mrb[0].mxu0
        %v1065 = vpop.f32.mrb[0].mxu0
        %v1066 = vadd.f32 0.0, %v1065
        %v1067 = vpop.f32.mrb[0].mxu0
        %1068 = vmatprep.mubr.bf16.mxu0 0
        %1069 = vmatmul.mubr.bf16.gmra.mrb[0].mxu0 %v1023
        %v1070 = vpop.f32.mrb[0].mxu0
        %v1071 = vadd.f32 0.0, %v1070
        %v1072 = vpop.f32.mrb[0].mxu0
        %v1073 = vpop.f32.mrb[0].mxu0
        %v1074 = vadd.f32 0.0, %v1073
        %v1075 = vpop.f32.mrb[0].mxu0
        %1076 = vdwg.mxu0
        %v1078 = vsel %vm966, %v904, 0
        %1080 = vmatprep.subr.bf16.mxu0 0
        %1081 = vmatpush1.bf16.msra.mxu0 %v1078
        %1082 = vmatprep.subr.bf16.mxu0 0
        %1083 = vmatpush1.bf16.msra.mxu0 0
        %1084 = vmatprep.subr.bf16.mxu0 0
        %1085 = vmatpush1.bf16.msra.mxu0 0
        %1086 = vmatprep.subr.bf16.mxu0 0
        %1087 = vmatpush1.bf16.msra.mxu0 0
        %1088 = vmatprep.subr.bf16.mxu0 0
        %1089 = vmatpush1.bf16.msra.mxu0 0
        %1090 = vmatprep.subr.bf16.mxu0 0
        %1091 = vmatpush1.bf16.msra.mxu0 0
        %1092 = vmatprep.subr.bf16.mxu0 0
        %1093 = vmatpush1.bf16.msra.mxu0 0
        %1094 = vmatprep.subr.bf16.mxu0 0
        %1095 = vmatpush1.bf16.msra.mxu0 0
        %1096 = vmatprep.subr.bf16.mxu0 0
        %1097 = vmatpush1.bf16.msra.mxu0 0
        %1098 = vmatprep.subr.bf16.mxu0 0
        %1099 = vmatpush1.bf16.msra.mxu0 0
        %1100 = vmatprep.subr.bf16.mxu0 0
        %1101 = vmatpush1.bf16.msra.mxu0 0
        %1102 = vmatprep.subr.bf16.mxu0 0
        %1103 = vmatpush1.bf16.msra.mxu0 0
        %1104 = vmatprep.subr.bf16.mxu0 0
        %1105 = vmatpush1.bf16.msra.mxu0 0
        %1106 = vmatprep.subr.bf16.mxu0 0
        %1107 = vmatpush1.bf16.msra.mxu0 0
        %1108 = vmatprep.subr.bf16.mxu0 0
        %1109 = vmatpush1.bf16.msra.mxu0 0
        %1110 = vmatprep.subr.bf16.mxu0 0
        %1111 = vmatpush1.bf16.msra.mxu0 0
        %1112 = vmatprep.mubr.bf16.mxu0 0
        %1113 = vmatmul.mubr.bf16.gmra.mrb[0].mxu0 %v1020
        %v1114 = vpop.f32.mrb[0].mxu0
        %v1115 = vadd.f32 0.0, %v1114
        %v1116 = vpop.f32.mrb[0].mxu0
        %v1117 = vpop.f32.mrb[0].mxu0
        %v1118 = vadd.f32 0.0, %v1117
        %v1119 = vpop.f32.mrb[0].mxu0
        %1120 = vmatprep.mubr.bf16.mxu0 0
        %1121 = vmatmul.mubr.bf16.gmra.mrb[0].mxu0 %v1023
        %v1122 = vpop.f32.mrb[0].mxu0
        %v1123 = vadd.f32 0.0, %v1122
        %v1124 = vpop.f32.mrb[0].mxu0
        %v1125 = vpop.f32.mrb[0].mxu0
        %v1126 = vadd.f32 0.0, %v1125
        %v1127 = vpop.f32.mrb[0].mxu0
        %1128 = vdwg.mxu0
        %v1129 = vlaneseq
        %v1130 = vshrl.u32 %v1129, 7
        %v1131 = vadd.s32 %v1130, 8
        %v1132 = vadd.s32 %v1130, 16
        %v1133 = vadd.s32 %v1130, 24
        %v1134 = vadd.s32 %v1130, 32
        %v1135 = vadd.s32 %v1130, 40
        %v1136 = vadd.s32 %v1130, 48
        %v1137 = vadd.s32 %v1130, 56
        %v1138 = vmul.u32 %v906, 16
        %vm1139 = vcmp.ge.s32.totalorder %v1130, %v1138
        %vm1140 = vcmp.ge.s32.totalorder %v1131, %v1138
        %vm1141 = vcmp.ge.s32.totalorder %v1132, %v1138
        %vm1142 = vcmp.ge.s32.totalorder %v1133, %v1138
        %vm1143 = vcmp.ge.s32.totalorder %v1134, %v1138
        %vm1144 = vcmp.ge.s32.totalorder %v1135, %v1138
        %vm1145 = vcmp.ge.s32.totalorder %v1136, %v1138
        %vm1146 = vcmp.ge.s32.totalorder %v1137, %v1138
        %v1147 = vadd.s32 %v906, 1
        %v1148 = vmul.u32 %v1147, 16
        %vm1149 = vcmp.lt.s32.totalorder %v1130, %v1148
        %vm1150 = vcmp.lt.s32.totalorder %v1131, %v1148
        %vm1151 = vcmp.lt.s32.totalorder %v1132, %v1148
        %vm1152 = vcmp.lt.s32.totalorder %v1133, %v1148
        %vm1153 = vcmp.lt.s32.totalorder %v1134, %v1148
        %vm1154 = vcmp.lt.s32.totalorder %v1135, %v1148
        %vm1155 = vcmp.lt.s32.totalorder %v1136, %v1148
        %vm1156 = vcmp.lt.s32.totalorder %v1137, %v1148
        %vm1157 = vmand %vm1139, %vm1149
        %vm1158 = vmand %vm1140, %vm1150
        %vm1159 = vmand %vm1141, %vm1151
        %vm1160 = vmand %vm1142, %vm1152
        %vm1161 = vmand %vm1143, %vm1153
        %vm1162 = vmand %vm1144, %vm1154
        %vm1163 = vmand %vm1145, %vm1155
        %vm1164 = vmand %vm1146, %vm1156
        %v1165 = vsel %vm1157, 1, 0
        %v1166 = vsel %vm1158, 1, 0
        %v1167 = vsel %vm1159, 1, 0
        %v1168 = vsel %vm1160, 1, 0
        %v1169 = vsel %vm1161, 1, 0
        %v1170 = vsel %vm1162, 1, 0
        %v1171 = vsel %vm1163, 1, 0
        %v1172 = vsel %vm1164, 1, 0
        %v1173 = vcvt.s32.f32 %v1165
        %v1174 = vcvt.s32.f32 %v1166
        %v1175 = vcvt.s32.f32 %v1167
        %v1176 = vcvt.s32.f32 %v1168
        %v1177 = vcvt.s32.f32 %v1169
        %v1178 = vcvt.s32.f32 %v1170
        %v1179 = vcvt.s32.f32 %v1171
        %v1180 = vcvt.s32.f32 %v1172
        %v1181 = vmul.f32 %v1005, %v1063
        %v1182 = vmul.f32 %v1008, %v1066
        %v1183 = vmul.f32 %v1013, %v1071
        %v1184 = vmul.f32 %v1016, %v1074
        %vm1185 = vcmask 523264
        %v1187 = vsel %vm1185, %v1181, 0
        %v1190 = vsel %vm1185, %v1182, 0
        %v1193 = vsel %vm1185, %v1183, 0
        %v1196 = vsel %vm1185, %v1184, 0
        %1198 = vmatprep.subr.mxu0 0.0
        %1199 = vmatpush1.msra.mxu0 %v1173
        %1200 = vmatprep.subr.mxu0 0.0
        %1201 = vmatpush1.msra.mxu0 %v1174
        %1202 = vmatprep.subr.mxu0 0.0
        %1203 = vmatpush1.msra.mxu0 %v1175
        %1204 = vmatprep.subr.mxu0 0.0
        %1205 = vmatpush1.msra.mxu0 %v1176
        %1206 = vmatprep.subr.mxu0 0.0
        %1207 = vmatpush1.msra.mxu0 %v1177
        %1208 = vmatprep.subr.mxu0 0.0
        %1209 = vmatpush1.msra.mxu0 %v1178
        %1210 = vmatprep.subr.mxu0 0.0
        %1211 = vmatpush1.msra.mxu0 %v1179
        %1212 = vmatprep.subr.mxu0 0.0
        %1213 = vmatpush1.msra.mxu0 %v1180
        %1214 = vmatprep.subr.mxu0 0.0
        %1215 = vmatpush1.msra.mxu0 0.0
        %1216 = vmatprep.subr.mxu0 0.0
        %1217 = vmatpush1.msra.mxu0 0.0
        %1218 = vmatprep.subr.mxu0 0.0
        %1219 = vmatpush1.msra.mxu0 0.0
        %1220 = vmatprep.subr.mxu0 0.0
        %1221 = vmatpush1.msra.mxu0 0.0
        %1222 = vmatprep.subr.mxu0 0.0
        %1223 = vmatpush1.msra.mxu0 0.0
        %1224 = vmatprep.subr.mxu0 0.0
        %1225 = vmatpush1.msra.mxu0 0.0
        %1226 = vmatprep.subr.mxu0 0.0
        %1227 = vmatpush1.msra.mxu0 0.0
        %1228 = vmatprep.subr.mxu0 0.0
        %1229 = vmatpush1.msra.mxu0 0.0
        %1230 = vmatprep.subr.mxu0 0.0
        %1231 = vmatpush1.msra.mxu0 0.0
        %1232 = vmatprep.subr.mxu0 0.0
        %1233 = vmatpush1.msra.mxu0 0.0
        %1234 = vmatprep.subr.mxu0 0.0
        %1235 = vmatpush1.msra.mxu0 0.0
        %1236 = vmatprep.subr.mxu0 0.0
        %1237 = vmatpush1.msra.mxu0 0.0
        %1238 = vmatprep.subr.mxu0 0.0
        %1239 = vmatpush1.msra.mxu0 0.0
        %1240 = vmatprep.subr.mxu0 0.0
        %1241 = vmatpush1.msra.mxu0 0.0
        %1242 = vmatprep.subr.mxu0 0.0
        %1243 = vmatpush1.msra.mxu0 0.0
        %1244 = vmatprep.subr.mxu0 0.0
        %1245 = vmatpush1.msra.mxu0 0.0
        %1246 = vmatprep.subr.mxu0 0.0
        %1247 = vmatpush1.msra.mxu0 0.0
        %1248 = vmatprep.subr.mxu0 0.0
        %1249 = vmatpush1.msra.mxu0 0.0
        %1250 = vmatprep.subr.mxu0 0.0
        %1251 = vmatpush1.msra.mxu0 0.0
        %1252 = vmatprep.subr.mxu0 0.0
        %1253 = vmatpush1.msra.mxu0 0.0
        %1254 = vmatprep.subr.mxu0 0.0
        %1255 = vmatpush1.msra.mxu0 0.0
        %1256 = vmatprep.subr.mxu0 0.0
        %1257 = vmatpush1.msra.mxu0 0.0
        %1258 = vmatprep.subr.mxu0 0.0
        %1259 = vmatpush1.msra.mxu0 0.0
        %1260 = vmatprep.subr.mxu0 0.0
        %1261 = vmatpush1.msra.mxu0 0.0
        %1262 = vmatprep.mubr.f32.mxu0 0.0
        %1263 = vmatmul.mubr.f32.gmra.mrb[0].mxu0 %v1187
        %v1264 = vpop.f32.mrb[0].mxu0
        %v1265 = vadd.f32 0.0, %v1264
        %v1266 = vpop.f32.mrb[0].mxu0
        %1267 = vmatprep.mubr.f32.mxu0 0.0
        %1268 = vmatmul.mubr.f32.gmra.mrb[0].mxu0 %v1190
        %v1269 = vpop.f32.mrb[0].mxu0
        %v1270 = vadd.f32 0.0, %v1269
        %v1271 = vpop.f32.mrb[0].mxu0
        %1272 = vmatprep.mubr.f32.mxu0 0.0
        %1273 = vmatmul.mubr.f32.gmra.mrb[0].mxu0 %v1193
        %v1274 = vpop.f32.mrb[0].mxu0
        %v1275 = vadd.f32 0.0, %v1274
        %v1276 = vpop.f32.mrb[0].mxu0
        %1277 = vmatprep.mubr.f32.mxu0 0.0
        %1278 = vmatmul.mubr.f32.gmra.mrb[0].mxu0 %v1196
        %v1279 = vpop.f32.mrb[0].mxu0
        %v1280 = vadd.f32 0.0, %v1279
        %v1281 = vpop.f32.mrb[0].mxu0
        %1282 = vdwg.mxu0
        %v1283 = vmul.f32 %v743, %v1265
        %v1284 = vmul.f32 %v746, %v1270
        %v1285 = vmul.f32 %v749, %v1275
        %v1286 = vmul.f32 %v752, %v1280
        %1288 = vset.pattern.permute.xlu0 0
        %1289 = vperm.xlu0 %1288, %v1283
        %v1290 = vpop.permute.xlu0 %1289
        %1293 = vset.pattern.permute.xlu0 0
        %1294 = vperm.xlu0 %1293, %v1284
        %v1295 = vpop.permute.xlu0 %1294
        %1298 = vset.pattern.permute.xlu0 0
        %1299 = vperm.xlu0 %1298, %v1285
        %v1300 = vpop.permute.xlu0 %1299
        %1303 = vset.pattern.permute.xlu0 0
        %1304 = vperm.xlu0 %1303, %v1286
        %v1305 = vpop.permute.xlu0 %1304
        %v1307 = vsel %vm919, %v1290, -1e+30
        %v1308 = vsel %vm920, %v1295, -1e+30
        %v1309 = vsel %vm921, %v1300, -1e+30
        %v1310 = vsel %vm922, %v1305, -1e+30
        %v1311 = vsel %vm959, %v1307, -inf
        %v1312 = vsel %vm959, %v1308, -inf
        %v1313 = vsel %vm959, %v1309, -inf
        %v1314 = vsel %vm959, %v1310, -inf
        %v1315 = vmax.f32 %v1311, %v1312
        %v1316 = vmax.f32 %v1313, %v1314
        %v1317 = vmax.f32 %v1315, %v1316
        %v1318 = vrot.slane %v1317, 4
        %v1319 = vmax.f32 %v1317, %v1318
        %v1320 = vrot.slane %v1319, 2
        %v1321 = vmax.f32 %v1319, %v1320
        %v1322 = vrot.slane %v1321, 1
        %v1323 = vmax.f32 %v1321, %v1322
        %1324 = vset.pattern.permute.xlu0 1
        %1325 = vperm.xlu0 %1324, %v1283
        %v1326 = vpop.permute.xlu0 %1325
        %1328 = vset.pattern.permute.xlu0 1
        %1329 = vperm.xlu0 %1328, %v1284
        %v1330 = vpop.permute.xlu0 %1329
        %1332 = vset.pattern.permute.xlu0 1
        %1333 = vperm.xlu0 %1332, %v1285
        %v1334 = vpop.permute.xlu0 %1333
        %1336 = vset.pattern.permute.xlu0 1
        %1337 = vperm.xlu0 %1336, %v1286
        %v1338 = vpop.permute.xlu0 %1337
        %v1340 = vsel %vm919, %v1326, -1e+30
        %v1341 = vsel %vm920, %v1330, -1e+30
        %v1342 = vsel %vm921, %v1334, -1e+30
        %v1343 = vsel %vm922, %v1338, -1e+30
        %v1344 = vsel %vm959, %v1340, -inf
        %v1345 = vsel %vm959, %v1341, -inf
        %v1346 = vsel %vm959, %v1342, -inf
        %v1347 = vsel %vm959, %v1343, -inf
        %v1348 = vmax.f32 %v1344, %v1345
        %v1349 = vmax.f32 %v1346, %v1347
        %v1350 = vmax.f32 %v1348, %v1349
        %v1351 = vrot.slane %v1350, 4
        %v1352 = vmax.f32 %v1350, %v1351
        %v1353 = vrot.slane %v1352, 2
        %v1354 = vmax.f32 %v1352, %v1353
        %v1355 = vrot.slane %v1354, 1
        %v1356 = vmax.f32 %v1354, %v1355
        %1357 = vset.pattern.permute.xlu0 2
        %1358 = vperm.xlu0 %1357, %v1283
        %v1359 = vpop.permute.xlu0 %1358
        %1361 = vset.pattern.permute.xlu0 2
        %1362 = vperm.xlu0 %1361, %v1284
        %v1363 = vpop.permute.xlu0 %1362
        %1365 = vset.pattern.permute.xlu0 2
        %1366 = vperm.xlu0 %1365, %v1285
        %v1367 = vpop.permute.xlu0 %1366
        %1369 = vset.pattern.permute.xlu0 2
        %1370 = vperm.xlu0 %1369, %v1286
        %v1371 = vpop.permute.xlu0 %1370
        %v1373 = vsel %vm919, %v1359, -1e+30
        %v1374 = vsel %vm920, %v1363, -1e+30
        %v1375 = vsel %vm921, %v1367, -1e+30
        %v1376 = vsel %vm922, %v1371, -1e+30
        %v1377 = vsel %vm959, %v1373, -inf
        %v1378 = vsel %vm959, %v1374, -inf
        %v1379 = vsel %vm959, %v1375, -inf
        %v1380 = vsel %vm959, %v1376, -inf
        %v1381 = vmax.f32 %v1377, %v1378
        %v1382 = vmax.f32 %v1379, %v1380
        %v1383 = vmax.f32 %v1381, %v1382
        %v1384 = vrot.slane %v1383, 4
        %v1385 = vmax.f32 %v1383, %v1384
        %v1386 = vrot.slane %v1385, 2
        %v1387 = vmax.f32 %v1385, %v1386
        %v1388 = vrot.slane %v1387, 1
        %v1389 = vmax.f32 %v1387, %v1388
        %1390 = vset.pattern.permute.xlu0 3
        %1391 = vperm.xlu0 %1390, %v1283
        %v1392 = vpop.permute.xlu0 %1391
        %1394 = vset.pattern.permute.xlu0 3
        %1395 = vperm.xlu0 %1394, %v1284
        %v1396 = vpop.permute.xlu0 %1395
        %1398 = vset.pattern.permute.xlu0 3
        %1399 = vperm.xlu0 %1398, %v1285
        %v1400 = vpop.permute.xlu0 %1399
        %1402 = vset.pattern.permute.xlu0 3
        %1403 = vperm.xlu0 %1402, %v1286
        %v1404 = vpop.permute.xlu0 %1403
        %v1406 = vsel %vm919, %v1392, -1e+30
        %v1407 = vsel %vm920, %v1396, -1e+30
        %v1408 = vsel %vm921, %v1400, -1e+30
        %v1409 = vsel %vm922, %v1404, -1e+30
        %v1410 = vsel %vm959, %v1406, -inf
        %v1411 = vsel %vm959, %v1407, -inf
        %v1412 = vsel %vm959, %v1408, -inf
        %v1413 = vsel %vm959, %v1409, -inf
        %v1414 = vmax.f32 %v1410, %v1411
        %v1415 = vmax.f32 %v1412, %v1413
        %v1416 = vmax.f32 %v1414, %v1415
        %v1417 = vrot.slane %v1416, 4
        %v1418 = vmax.f32 %v1416, %v1417
        %v1419 = vrot.slane %v1418, 2
        %v1420 = vmax.f32 %v1418, %v1419
        %v1421 = vrot.slane %v1420, 1
        %v1422 = vmax.f32 %v1420, %v1421
        %vm1423 = vcmask 1040384
        %v1424 = vsel %vm1423, %v1323, %v1356
        %vm1425 = vcmask 1041408
        %v1426 = vsel %vm1425, %v1424, %v1389
        %vm1427 = vcmask 1042432
        %v1428 = vsel %vm1427, %v1426, %v1422
        %v1430 = vsel %vm959, %v943, 0
        %v1433 = vsel %vm959, %v944, 0
        %v1436 = vsel %vm959, %v945, 0
        %v1439 = vsel %vm959, %v946, 0
        %v1442 = vsel %vm959, %v1428, 0
        %1444 = vmatprep.subr.mxu0 0.0
        %1445 = vmatpush1.xpose.msra.mxu0 %v1442
        %1446 = vmatprep.subr.mxu0 0.0
        %1447 = vmatpush1.xpose.msra.mxu0 0.0
        %1448 = vmatprep.subr.mxu0 0.0
        %1449 = vmatpush1.xpose.msra.mxu0 0.0
        %1450 = vmatprep.subr.mxu0 0.0
        %1451 = vmatpush1.xpose.msra.mxu0 0.0
        %1452 = vmatprep.subr.mxu0 0.0
        %1453 = vmatpush1.xpose.msra.mxu0 0.0
        %1454 = vmatprep.subr.mxu0 0.0
        %1455 = vmatpush1.xpose.msra.mxu0 0.0
        %1456 = vmatprep.subr.mxu0 0.0
        %1457 = vmatpush1.xpose.msra.mxu0 0.0
        %1458 = vmatprep.subr.mxu0 0.0
        %1459 = vmatpush1.xpose.msra.mxu0 0.0
        %1460 = vmatprep.subr.mxu0 0.0
        %1461 = vmatpush1.xpose.msra.mxu0 0.0
        %1462 = vmatprep.subr.mxu0 0.0
        %1463 = vmatpush1.xpose.msra.mxu0 0.0
        %1464 = vmatprep.subr.mxu0 0.0
        %1465 = vmatpush1.xpose.msra.mxu0 0.0
        %1466 = vmatprep.subr.mxu0 0.0
        %1467 = vmatpush1.xpose.msra.mxu0 0.0
        %1468 = vmatprep.subr.mxu0 0.0
        %1469 = vmatpush1.xpose.msra.mxu0 0.0
        %1470 = vmatprep.subr.mxu0 0.0
        %1471 = vmatpush1.xpose.msra.mxu0 0.0
        %1472 = vmatprep.subr.mxu0 0.0
        %1473 = vmatpush1.xpose.msra.mxu0 0.0
        %1474 = vmatprep.subr.mxu0 0.0
        %1475 = vmatpush1.xpose.msra.mxu0 0.0
        %1476 = vmatprep.subr.mxu0 0.0
        %1477 = vmatpush1.xpose.msra.mxu0 0.0
        %1478 = vmatprep.subr.mxu0 0.0
        %1479 = vmatpush1.xpose.msra.mxu0 0.0
        %1480 = vmatprep.subr.mxu0 0.0
        %1481 = vmatpush1.xpose.msra.mxu0 0.0
        %1482 = vmatprep.subr.mxu0 0.0
        %1483 = vmatpush1.xpose.msra.mxu0 0.0
        %1484 = vmatprep.subr.mxu0 0.0
        %1485 = vmatpush1.xpose.msra.mxu0 0.0
        %1486 = vmatprep.subr.mxu0 0.0
        %1487 = vmatpush1.xpose.msra.mxu0 0.0
        %1488 = vmatprep.subr.mxu0 0.0
        %1489 = vmatpush1.xpose.msra.mxu0 0.0
        %1490 = vmatprep.subr.mxu0 0.0
        %1491 = vmatpush1.xpose.msra.mxu0 0.0
        %1492 = vmatprep.subr.mxu0 0.0
        %1493 = vmatpush1.xpose.msra.mxu0 0.0
        %1494 = vmatprep.subr.mxu0 0.0
        %1495 = vmatpush1.xpose.msra.mxu0 0.0
        %1496 = vmatprep.subr.mxu0 0.0
        %1497 = vmatpush1.xpose.msra.mxu0 0.0
        %1498 = vmatprep.subr.mxu0 0.0
        %1499 = vmatpush1.xpose.msra.mxu0 0.0
        %1500 = vmatprep.subr.mxu0 0.0
        %1501 = vmatpush1.xpose.msra.mxu0 0.0
        %1502 = vmatprep.subr.mxu0 0.0
        %1503 = vmatpush1.xpose.msra.mxu0 0.0
        %1504 = vmatprep.subr.mxu0 0.0
        %1505 = vmatpush1.xpose.msra.mxu0 0.0
        %1506 = vmatprep.subr.mxu0 0.0
        %1507 = vmatpush1.xpose.msra.mxu0 0.0
        %1508 = vmatprep.mubr.f32.mxu0 0.0
        %1509 = vmatmul.mubr.f32.gmra.mrb[0].mxu0 %v1430
        %v1510 = vpop.f32.mrb[0].mxu0
        %v1511 = vadd.f32 0.0, %v1510
        %v1512 = vpop.f32.mrb[0].mxu0
        %1513 = vmatprep.mubr.f32.mxu0 0.0
        %1514 = vmatmul.mubr.f32.gmra.mrb[0].mxu0 %v1433
        %v1515 = vpop.f32.mrb[0].mxu0
        %v1516 = vadd.f32 0.0, %v1515
        %v1517 = vpop.f32.mrb[0].mxu0
        %1518 = vmatprep.mubr.f32.mxu0 0.0
        %1519 = vmatmul.mubr.f32.gmra.mrb[0].mxu0 %v1436
        %v1520 = vpop.f32.mrb[0].mxu0
        %v1521 = vadd.f32 0.0, %v1520
        %v1522 = vpop.f32.mrb[0].mxu0
        %1523 = vmatprep.mubr.f32.mxu0 0.0
        %1524 = vmatmul.mubr.f32.gmra.mrb[0].mxu0 %v1439
        %v1525 = vpop.f32.mrb[0].mxu0
        %v1526 = vadd.f32 0.0, %v1525
        %v1527 = vpop.f32.mrb[0].mxu0
        %1528 = vdwg.mxu0
        %v1529 = vsub.f32 %v1283, %v1511
        %v1530 = vsub.f32 %v1284, %v1516
        %v1531 = vsub.f32 %v1285, %v1521
        %v1532 = vsub.f32 %v1286, %v1526
        %v1533 = vmul.f32 %v1529, 1.442695
        %v1534 = vpow.pop %v1533
        %v1535 = vmul.f32 %v1530, 1.442695
        %v1536 = vpow.pop %v1535
        %v1537 = vmul.f32 %v1531, 1.442695
        %v1538 = vpow.pop %v1537
        %v1539 = vmul.f32 %v1532, 1.442695
        %v1540 = vpow.pop %v1539
        %1541 = vxpose.xlu0.b32.start [1/16] %v1534, 128
        %1542 = vxpose.xlu0.b32.cont [2/16] %v1536, 128
        %1543 = vxpose.xlu0.b32.cont [3/16] %v1538, 128
        %1544 = vxpose.xlu0.b32.cont [4/16] %v1540, 128
        %1545 = vxpose.xlu0.b32.cont [5/16] 0.0, 128
        %1546 = vxpose.xlu0.b32.cont [6/16] 0.0, 128
        %1547 = vxpose.xlu0.b32.cont [7/16] 0.0, 128
        %1548 = vxpose.xlu0.b32.cont [8/16] 0.0, 128
        %1549 = vxpose.xlu0.b32.cont [9/16] 0.0, 128
        %1550 = vxpose.xlu0.b32.cont [10/16] 0.0, 128
        %1551 = vxpose.xlu0.b32.cont [11/16] 0.0, 128
        %1552 = vxpose.xlu0.b32.cont [12/16] 0.0, 128
        %1553 = vxpose.xlu0.b32.cont [13/16] 0.0, 128
        %1554 = vxpose.xlu0.b32.cont [14/16] 0.0, 128
        %1555 = vxpose.xlu0.b32.cont [15/16] 0.0, 128
        %1556 = vxpose.xlu0.b32.end [16/16] 0.0, 128
        %v1557 = vpop.trf.xlu0
        %v1558 = vpop.trf.xlu0
        %v1559 = vpop.trf.xlu0
        %v1560 = vpop.trf.xlu0
        %v1561 = vpop.trf.xlu0
        %v1562 = vpop.trf.xlu0
        %v1563 = vpop.trf.xlu0
        %v1564 = vpop.trf.xlu0
        %v1565 = vpop.trf.xlu0
        %v1566 = vpop.trf.xlu0
        %v1567 = vpop.trf.xlu0
        %v1568 = vpop.trf.xlu0
        %v1569 = vpop.trf.xlu0
        %v1570 = vpop.trf.xlu0
        %v1571 = vpop.trf.xlu0
        %v1572 = vpop.trf.xlu0
        %vm1573 = vcmask 261120
        %v1575 = vsel %vm1573, %v1557, 0
        %1577 = vmatprep.subr.mxu0 0.0
        %1578 = vmatpush1.msra.mxu0 %v943
        %1579 = vmatprep.subr.mxu0 0.0
        %1580 = vmatpush1.msra.mxu0 %v944
        %1581 = vmatprep.subr.mxu0 0.0
        %1582 = vmatpush1.msra.mxu0 %v945
        %1583 = vmatprep.subr.mxu0 0.0
        %1584 = vmatpush1.msra.mxu0 %v946
        %1585 = vmatprep.subr.mxu0 0.0
        %1586 = vmatpush1.msra.mxu0 0.0
        %1587 = vmatprep.subr.mxu0 0.0
        %1588 = vmatpush1.msra.mxu0 0.0
        %1589 = vmatprep.subr.mxu0 0.0
        %1590 = vmatpush1.msra.mxu0 0.0
        %1591 = vmatprep.subr.mxu0 0.0
        %1592 = vmatpush1.msra.mxu0 0.0
        %1593 = vmatprep.subr.mxu0 0.0
        %1594 = vmatpush1.msra.mxu0 0.0
        %1595 = vmatprep.subr.mxu0 0.0
        %1596 = vmatpush1.msra.mxu0 0.0
        %1597 = vmatprep.subr.mxu0 0.0
        %1598 = vmatpush1.msra.mxu0 0.0
        %1599 = vmatprep.subr.mxu0 0.0
        %1600 = vmatpush1.msra.mxu0 0.0
        %1601 = vmatprep.subr.mxu0 0.0
        %1602 = vmatpush1.msra.mxu0 0.0
        %1603 = vmatprep.subr.mxu0 0.0
        %1604 = vmatpush1.msra.mxu0 0.0
        %1605 = vmatprep.subr.mxu0 0.0
        %1606 = vmatpush1.msra.mxu0 0.0
        %1607 = vmatprep.subr.mxu0 0.0
        %1608 = vmatpush1.msra.mxu0 0.0
        %1609 = vmatprep.subr.mxu0 0.0
        %1610 = vmatpush1.msra.mxu0 0.0
        %1611 = vmatprep.subr.mxu0 0.0
        %1612 = vmatpush1.msra.mxu0 0.0
        %1613 = vmatprep.subr.mxu0 0.0
        %1614 = vmatpush1.msra.mxu0 0.0
        %1615 = vmatprep.subr.mxu0 0.0
        %1616 = vmatpush1.msra.mxu0 0.0
        %1617 = vmatprep.subr.mxu0 0.0
        %1618 = vmatpush1.msra.mxu0 0.0
        %1619 = vmatprep.subr.mxu0 0.0
        %1620 = vmatpush1.msra.mxu0 0.0
        %1621 = vmatprep.subr.mxu0 0.0
        %1622 = vmatpush1.msra.mxu0 0.0
        %1623 = vmatprep.subr.mxu0 0.0
        %1624 = vmatpush1.msra.mxu0 0.0
        %1625 = vmatprep.subr.mxu0 0.0
        %1626 = vmatpush1.msra.mxu0 0.0
        %1627 = vmatprep.subr.mxu0 0.0
        %1628 = vmatpush1.msra.mxu0 0.0
        %1629 = vmatprep.subr.mxu0 0.0
        %1630 = vmatpush1.msra.mxu0 0.0
        %1631 = vmatprep.subr.mxu0 0.0
        %1632 = vmatpush1.msra.mxu0 0.0
        %1633 = vmatprep.subr.mxu0 0.0
        %1634 = vmatpush1.msra.mxu0 0.0
        %1635 = vmatprep.subr.mxu0 0.0
        %1636 = vmatpush1.msra.mxu0 0.0
        %1637 = vmatprep.subr.mxu0 0.0
        %1638 = vmatpush1.msra.mxu0 0.0
        %1639 = vmatprep.subr.mxu0 0.0
        %1640 = vmatpush1.msra.mxu0 0.0
        %1641 = vmatprep.mubr.f32.mxu0 0.0
        %1642 = vmatmul.mubr.f32.gmra.mrb[0].mxu0 %v1575
        %v1643 = vpop.f32.mrb[0].mxu0
        %v1644 = vadd.f32 0.0, %v1643
        %v1645 = vpop.f32.mrb[0].mxu0
        %1646 = vdwg.mxu0
        %vm1647 = vcmp.gt.f32.partialorder %v1644, 0.0
        %v1648 = vlog2.pop %v1644
        %v1649 = vmul.f32 %v1648, 0.6931472
        %v1650 = vadd.f32 %v1428, %v1649
        %v1651 = vsel %vm1647, %v1650, 0.0
        %v1653 = vsel %vm959, %v1651, 0
        %1655 = vmatprep.subr.mxu0 0.0
        %1656 = vmatpush1.xpose.msra.mxu0 %v1653
        %1657 = vmatprep.subr.mxu0 0.0
        %1658 = vmatpush1.xpose.msra.mxu0 0.0
        %1659 = vmatprep.subr.mxu0 0.0
        %1660 = vmatpush1.xpose.msra.mxu0 0.0
        %1661 = vmatprep.subr.mxu0 0.0
        %1662 = vmatpush1.xpose.msra.mxu0 0.0
        %1663 = vmatprep.subr.mxu0 0.0
        %1664 = vmatpush1.xpose.msra.mxu0 0.0
        %1665 = vmatprep.subr.mxu0 0.0
        %1666 = vmatpush1.xpose.msra.mxu0 0.0
        %1667 = vmatprep.subr.mxu0 0.0
        %1668 = vmatpush1.xpose.msra.mxu0 0.0
        %1669 = vmatprep.subr.mxu0 0.0
        %1670 = vmatpush1.xpose.msra.mxu0 0.0
        %1671 = vmatprep.subr.mxu0 0.0
        %1672 = vmatpush1.xpose.msra.mxu0 0.0
        %1673 = vmatprep.subr.mxu0 0.0
        %1674 = vmatpush1.xpose.msra.mxu0 0.0
        %1675 = vmatprep.subr.mxu0 0.0
        %1676 = vmatpush1.xpose.msra.mxu0 0.0
        %1677 = vmatprep.subr.mxu0 0.0
        %1678 = vmatpush1.xpose.msra.mxu0 0.0
        %1679 = vmatprep.subr.mxu0 0.0
        %1680 = vmatpush1.xpose.msra.mxu0 0.0
        %1681 = vmatprep.subr.mxu0 0.0
        %1682 = vmatpush1.xpose.msra.mxu0 0.0
        %1683 = vmatprep.subr.mxu0 0.0
        %1684 = vmatpush1.xpose.msra.mxu0 0.0
        %1685 = vmatprep.subr.mxu0 0.0
        %1686 = vmatpush1.xpose.msra.mxu0 0.0
        %1687 = vmatprep.subr.mxu0 0.0
        %1688 = vmatpush1.xpose.msra.mxu0 0.0
        %1689 = vmatprep.subr.mxu0 0.0
        %1690 = vmatpush1.xpose.msra.mxu0 0.0
        %1691 = vmatprep.subr.mxu0 0.0
        %1692 = vmatpush1.xpose.msra.mxu0 0.0
        %1693 = vmatprep.subr.mxu0 0.0
        %1694 = vmatpush1.xpose.msra.mxu0 0.0
        %1695 = vmatprep.subr.mxu0 0.0
        %1696 = vmatpush1.xpose.msra.mxu0 0.0
        %1697 = vmatprep.subr.mxu0 0.0
        %1698 = vmatpush1.xpose.msra.mxu0 0.0
        %1699 = vmatprep.subr.mxu0 0.0
        %1700 = vmatpush1.xpose.msra.mxu0 0.0
        %1701 = vmatprep.subr.mxu0 0.0
        %1702 = vmatpush1.xpose.msra.mxu0 0.0
        %1703 = vmatprep.subr.mxu0 0.0
        %1704 = vmatpush1.xpose.msra.mxu0 0.0
        %1705 = vmatprep.subr.mxu0 0.0
        %1706 = vmatpush1.xpose.msra.mxu0 0.0
        %1707 = vmatprep.subr.mxu0 0.0
        %1708 = vmatpush1.xpose.msra.mxu0 0.0
        %1709 = vmatprep.subr.mxu0 0.0
        %1710 = vmatpush1.xpose.msra.mxu0 0.0
        %1711 = vmatprep.subr.mxu0 0.0
        %1712 = vmatpush1.xpose.msra.mxu0 0.0
        %1713 = vmatprep.subr.mxu0 0.0
        %1714 = vmatpush1.xpose.msra.mxu0 0.0
        %1715 = vmatprep.subr.mxu0 0.0
        %1716 = vmatpush1.xpose.msra.mxu0 0.0
        %1717 = vmatprep.subr.mxu0 0.0
        %1718 = vmatpush1.xpose.msra.mxu0 0.0
        %1719 = vmatprep.mubr.f32.mxu0 0.0
        %1720 = vmatmul.mubr.f32.gmra.mrb[0].mxu0 %v1430
        %v1721 = vpop.f32.mrb[0].mxu0
        %v1722 = vadd.f32 0.0, %v1721
        %v1723 = vpop.f32.mrb[0].mxu0
        %1724 = vmatprep.mubr.f32.mxu0 0.0
        %1725 = vmatmul.mubr.f32.gmra.mrb[0].mxu0 %v1433
        %v1726 = vpop.f32.mrb[0].mxu0
        %v1727 = vadd.f32 0.0, %v1726
        %v1728 = vpop.f32.mrb[0].mxu0
        %1729 = vmatprep.mubr.f32.mxu0 0.0
        %1730 = vmatmul.mubr.f32.gmra.mrb[0].mxu0 %v1436
        %v1731 = vpop.f32.mrb[0].mxu0
        %v1732 = vadd.f32 0.0, %v1731
        %v1733 = vpop.f32.mrb[0].mxu0
        %1734 = vmatprep.mubr.f32.mxu0 0.0
        %1735 = vmatmul.mubr.f32.gmra.mrb[0].mxu0 %v1439
        %v1736 = vpop.f32.mrb[0].mxu0
        %v1737 = vadd.f32 0.0, %v1736
        %v1738 = vpop.f32.mrb[0].mxu0
        %1739 = vdwg.mxu0
        %v1740 = vsub.f32 %v1283, %v1722
        %v1741 = vsub.f32 %v1284, %v1727
        %v1742 = vsub.f32 %v1285, %v1732
        %v1743 = vsub.f32 %v1286, %v1737
        %v1745 = vsel %vm721, %v1740, 0
        %v1748 = vsel %vm721, %v1741, 0
        %v1751 = vsel %vm721, %v1742, 0
        %v1754 = vsel %vm721, %v1743, 0
        %v1757 = vsel %vm721, %v1173, 0
        %v1760 = vsel %vm721, %v1174, 0
        %v1763 = vsel %vm721, %v1175, 0
        %v1766 = vsel %vm721, %v1176, 0
        %v1769 = vsel %vm721, %v1177, 0
        %v1772 = vsel %vm721, %v1178, 0
        %v1775 = vsel %vm721, %v1179, 0
        %v1778 = vsel %vm721, %v1180, 0
        %1780 = vmatprep.subr.mxu0 0.0
        %1781 = vmatpush1.xpose.msra.mxu0 %v1757
        %1782 = vmatprep.subr.mxu0 0.0
        %1783 = vmatpush1.xpose.msra.mxu0 %v1760
        %1784 = vmatprep.subr.mxu0 0.0
        %1785 = vmatpush1.xpose.msra.mxu0 %v1763
        %1786 = vmatprep.subr.mxu0 0.0
        %1787 = vmatpush1.xpose.msra.mxu0 %v1766
        %1788 = vmatprep.subr.mxu0 0.0
        %1789 = vmatpush1.xpose.msra.mxu0 %v1769
        %1790 = vmatprep.subr.mxu0 0.0
        %1791 = vmatpush1.xpose.msra.mxu0 %v1772
        %1792 = vmatprep.subr.mxu0 0.0
        %1793 = vmatpush1.xpose.msra.mxu0 %v1775
        %1794 = vmatprep.subr.mxu0 0.0
        %1795 = vmatpush1.xpose.msra.mxu0 %v1778
        %1796 = vmatprep.subr.mxu0 0.0
        %1797 = vmatpush1.xpose.msra.mxu0 0.0
        %1798 = vmatprep.subr.mxu0 0.0
        %1799 = vmatpush1.xpose.msra.mxu0 0.0
        %1800 = vmatprep.subr.mxu0 0.0
        %1801 = vmatpush1.xpose.msra.mxu0 0.0
        %1802 = vmatprep.subr.mxu0 0.0
        %1803 = vmatpush1.xpose.msra.mxu0 0.0
        %1804 = vmatprep.subr.mxu0 0.0
        %1805 = vmatpush1.xpose.msra.mxu0 0.0
        %1806 = vmatprep.subr.mxu0 0.0
        %1807 = vmatpush1.xpose.msra.mxu0 0.0
        %1808 = vmatprep.subr.mxu0 0.0
        %1809 = vmatpush1.xpose.msra.mxu0 0.0
        %1810 = vmatprep.subr.mxu0 0.0
        %1811 = vmatpush1.xpose.msra.mxu0 0.0
        %1812 = vmatprep.subr.mxu0 0.0
        %1813 = vmatpush1.xpose.msra.mxu0 0.0
        %1814 = vmatprep.subr.mxu0 0.0
        %1815 = vmatpush1.xpose.msra.mxu0 0.0
        %1816 = vmatprep.subr.mxu0 0.0
        %1817 = vmatpush1.xpose.msra.mxu0 0.0
        %1818 = vmatprep.subr.mxu0 0.0
        %1819 = vmatpush1.xpose.msra.mxu0 0.0
        %1820 = vmatprep.subr.mxu0 0.0
        %1821 = vmatpush1.xpose.msra.mxu0 0.0
        %1822 = vmatprep.subr.mxu0 0.0
        %1823 = vmatpush1.xpose.msra.mxu0 0.0
        %1824 = vmatprep.subr.mxu0 0.0
        %1825 = vmatpush1.xpose.msra.mxu0 0.0
        %1826 = vmatprep.subr.mxu0 0.0
        %1827 = vmatpush1.xpose.msra.mxu0 0.0
        %1828 = vmatprep.subr.mxu0 0.0
        %1829 = vmatpush1.xpose.msra.mxu0 0.0
        %1830 = vmatprep.subr.mxu0 0.0
        %1831 = vmatpush1.xpose.msra.mxu0 0.0
        %1832 = vmatprep.subr.mxu0 0.0
        %1833 = vmatpush1.xpose.msra.mxu0 0.0
        %1834 = vmatprep.subr.mxu0 0.0
        %1835 = vmatpush1.xpose.msra.mxu0 0.0
        %1836 = vmatprep.subr.mxu0 0.0
        %1837 = vmatpush1.xpose.msra.mxu0 0.0
        %1838 = vmatprep.subr.mxu0 0.0
        %1839 = vmatpush1.xpose.msra.mxu0 0.0
        %1840 = vmatprep.subr.mxu0 0.0
        %1841 = vmatpush1.xpose.msra.mxu0 0.0
        %1842 = vmatprep.subr.mxu0 0.0
        %1843 = vmatpush1.xpose.msra.mxu0 0.0
        %1844 = vmatprep.mubr.f32.mxu0 0.0
        %1845 = vmatmul.mubr.f32.gmra.mrb[0].mxu0 %v1745
        %v1846 = vpop.f32.mrb[0].mxu0
        %v1847 = vadd.f32 0.0, %v1846
        %v1848 = vpop.f32.mrb[0].mxu0
        %1849 = vmatprep.mubr.f32.mxu0 0.0
        %1850 = vmatmul.mubr.f32.gmra.mrb[0].mxu0 %v1748
        %v1851 = vpop.f32.mrb[0].mxu0
        %v1852 = vadd.f32 0.0, %v1851
        %v1853 = vpop.f32.mrb[0].mxu0
        %1854 = vmatprep.mubr.f32.mxu0 0.0
        %1855 = vmatmul.mubr.f32.gmra.mrb[0].mxu0 %v1751
        %v1856 = vpop.f32.mrb[0].mxu0
        %v1857 = vadd.f32 0.0, %v1856
        %v1858 = vpop.f32.mrb[0].mxu0
        %1859 = vmatprep.mubr.f32.mxu0 0.0
        %1860 = vmatmul.mubr.f32.gmra.mrb[0].mxu0 %v1754
        %v1861 = vpop.f32.mrb[0].mxu0
        %v1862 = vadd.f32 0.0, %v1861
        %v1863 = vpop.f32.mrb[0].mxu0
        %1864 = vdwg.mxu0
        %v1865 = vmul.f32 %v1847, %v1115
        %v1866 = vmul.f32 %v1852, %v1118
        %v1867 = vmul.f32 %v1857, %v1123
        %v1868 = vmul.f32 %v1862, %v1126
        %v1869 = vpack.c.bf16 %v1866, %v1865
        %v1870 = vpack.c.bf16 %v1868, %v1867
        %1871 = vxpose.xlu0.c.b16.start [1/8] %v1869, 128
        %1872 = vxpose.xlu0.c.b16.cont [2/8] %v1870, 128
        %1873 = vxpose.xlu0.c.b16.cont [3/8] 0, 128
        %1874 = vxpose.xlu0.c.b16.cont [4/8] 0, 128
        %1875 = vxpose.xlu0.c.b16.cont [5/8] 0, 128
        %1876 = vxpose.xlu0.c.b16.cont [6/8] 0, 128
        %1877 = vxpose.xlu0.c.b16.cont [7/8] 0, 128
        %1878 = vxpose.xlu0.c.b16.end [8/8] 0, 128
        %v1879 = vpop.trf.xlu0
        %v1880 = vpop.trf.xlu0
        %v1881 = vpop.trf.xlu0
        %v1882 = vpop.trf.xlu0
        %v1883 = vpop.trf.xlu0
        %v1884 = vpop.trf.xlu0
        %v1885 = vpop.trf.xlu0
        %v1886 = vpop.trf.xlu0
        %v1888 = vsel %vm1573, %v1879, 0
        %v1891 = vsel %vm1573, %v1880, 0
        %v1894 = vsel %vm1573, %v1881, 0
        %v1897 = vsel %vm1573, %v1882, 0
        %1899 = vmatprep.subr.bf16.mxu0 0
        %1900 = vmatpush1.bf16.msra.mxu0 %v947
        %1901 = vmatprep.subr.bf16.mxu0 0
        %1902 = vmatpush1.bf16.msra.mxu0 %v948
        %1903 = vmatprep.subr.bf16.mxu0 0
        %1904 = vmatpush1.bf16.msra.mxu0 0
        %1905 = vmatprep.subr.bf16.mxu0 0
        %1906 = vmatpush1.bf16.msra.mxu0 0
        %1907 = vmatprep.subr.bf16.mxu0 0
        %1908 = vmatpush1.bf16.msra.mxu0 0
        %1909 = vmatprep.subr.bf16.mxu0 0
        %1910 = vmatpush1.bf16.msra.mxu0 0
        %1911 = vmatprep.subr.bf16.mxu0 0
        %1912 = vmatpush1.bf16.msra.mxu0 0
        %1913 = vmatprep.subr.bf16.mxu0 0
        %1914 = vmatpush1.bf16.msra.mxu0 0
        %1915 = vmatprep.subr.bf16.mxu0 0
        %1916 = vmatpush1.bf16.msra.mxu0 0
        %1917 = vmatprep.subr.bf16.mxu0 0
        %1918 = vmatpush1.bf16.msra.mxu0 0
        %1919 = vmatprep.subr.bf16.mxu0 0
        %1920 = vmatpush1.bf16.msra.mxu0 0
        %1921 = vmatprep.subr.bf16.mxu0 0
        %1922 = vmatpush1.bf16.msra.mxu0 0
        %1923 = vmatprep.subr.bf16.mxu0 0
        %1924 = vmatpush1.bf16.msra.mxu0 0
        %1925 = vmatprep.subr.bf16.mxu0 0
        %1926 = vmatpush1.bf16.msra.mxu0 0
        %1927 = vmatprep.subr.bf16.mxu0 0
        %1928 = vmatpush1.bf16.msra.mxu0 0
        %1929 = vmatprep.subr.bf16.mxu0 0
        %1930 = vmatpush1.bf16.msra.mxu0 0
        %1931 = vmatprep.mubr.bf16.mxu0 0
        %1932 = vmatmul.mubr.bf16.gmra.mrb[0].mxu0 %v1888
        %v1933 = vpop.f32.mrb[0].mxu0
        %v1934 = vadd.f32 0.0, %v1933
        %v1935 = vpop.f32.mrb[0].mxu0
        %v1936 = vpop.f32.mrb[0].mxu0
        %v1937 = vadd.f32 0.0, %v1936
        %v1938 = vpop.f32.mrb[0].mxu0
        %1939 = vmatprep.mubr.bf16.mxu0 0
        %1940 = vmatmul.mubr.bf16.gmra.mrb[0].mxu0 %v1891
        %v1941 = vpop.f32.mrb[0].mxu0
        %v1942 = vadd.f32 0.0, %v1941
        %v1943 = vpop.f32.mrb[0].mxu0
        %v1944 = vpop.f32.mrb[0].mxu0
        %v1945 = vadd.f32 0.0, %v1944
        %v1946 = vpop.f32.mrb[0].mxu0
        %1947 = vmatprep.mubr.bf16.mxu0 0
        %1948 = vmatmul.mubr.bf16.gmra.mrb[0].mxu0 %v1894
        %v1949 = vpop.f32.mrb[0].mxu0
        %v1950 = vadd.f32 0.0, %v1949
        %v1951 = vpop.f32.mrb[0].mxu0
        %v1952 = vpop.f32.mrb[0].mxu0
        %v1953 = vadd.f32 0.0, %v1952
        %v1954 = vpop.f32.mrb[0].mxu0
        %1955 = vmatprep.mubr.bf16.mxu0 0
        %1956 = vmatmul.mubr.bf16.gmra.mrb[0].mxu0 %v1897
        %v1957 = vpop.f32.mrb[0].mxu0
        %v1958 = vadd.f32 0.0, %v1957
        %v1959 = vpop.f32.mrb[0].mxu0
        %v1960 = vpop.f32.mrb[0].mxu0
        %v1961 = vadd.f32 0.0, %v1960
        %v1962 = vpop.f32.mrb[0].mxu0
        %1963 = vdwg.mxu0
        %1964 = vst.msk [vmem:[%s570] sm:$0xff] %vm959, %v1934
        %1965 = vst.msk [vmem:[%s570 + $0x8] sm:$0xff] %vm959, %v1937
        %1966 = vst.msk [vmem:[%s570 + $0x10] sm:$0xff] %vm959, %v1942
        %1967 = vst.msk [vmem:[%s570 + $0x18] sm:$0xff] %vm959, %v1945
        %1968 = vst.msk [vmem:[%s570 + $0x20] sm:$0xff] %vm959, %v1950
        %1969 = vst.msk [vmem:[%s570 + $0x28] sm:$0xff] %vm959, %v1953
        %1970 = vst.msk [vmem:[%s570 + $0x30] sm:$0xff] %vm959, %v1958
        %1971 = vst.msk [vmem:[%s570 + $0x38] sm:$0xff] %vm959, %v1961
        %s1972 = sand.u32 %s255, 1
        %s1973 = scalar_lea.sflag [#allocation4], %s1972
        %s1974 = sand.u32 %s255, 1
        %s1975 = smul.addr %s1974, 64
        %s1976 = scalar_lea.vmem [#allocation15], %s1975
        // Predicated region
        $region93: #{tpu_custom_call.1} parent=55 // pred_check
          %p1977 = pneg %p265
        $region94: #{tpu_custom_call.1} parent=55 // pred_check_branch
          %1979 = sbr.rel (%p1977) target = $region96
        $region95: #{tpu_custom_call.1} parent=55 // pred_region
          %s1981 = ssub.s32 1024, 1024
          %1982 = vsyncadd %s1973, %s1981
          %s1983 = smul.addr %s28, 8
          %s1984 = smul.addr %s1983, 128
          %s1985 = scalar_lea.hbm %s9, %s1984
          %s1986 = sshll.u32 %s1976, 4
          %s1987 = int_to_ptr.vmem [resolvable:$true] %s1986
          %1992 = dma.vmem_to_hbm [thread:$0]  %s1987, 1024, %s1985, %s1973, 128, 128, 8
        $region96: #{tpu_custom_call.1} parent=55 // pred_fallthru
          _
      $region56: #{tpu_custom_call.1} parent=5 // pred_fallthru
        _
      %p1993 = scmp.le.s32.totalorder 2, %s23
      // Predicated region
      $region97: #{tpu_custom_call.1} parent=5 // pred_check
        %p1994 = pneg %p1993
      $region98: #{tpu_custom_call.1} parent=5 // pred_check_branch
        %1996 = sbr.rel (%p1994) target = $region100
      $region99: #{tpu_custom_call.1} parent=5 // pred_region
        %s1997 = ssub.s32 %s23, 2
        // Predicated region
        $region101: #{tpu_custom_call.1} parent=99 // pred_check
          %p1998 = pneg %p271
        $region102: #{tpu_custom_call.1} parent=99 // pred_check_branch
          %2000 = sbr.rel (%p1998) target = $region104
        $region103: #{tpu_custom_call.1} parent=99 // pred_region
          %s2001 = sand.u32 %s256, 1
          %s2002 = scalar_lea.sflag [#allocation4], %s2001
          %s2003 = sand.u32 %s256, 1
          %s2004 = smul.addr %s2003, 64
          %s2005 = scalar_lea.vmem [#allocation15], %s2004
          %2006 = dma.done %s2002, 1024
        $region104: #{tpu_custom_call.1} parent=99 // pred_fallthru
          _
      $region100: #{tpu_custom_call.1} parent=5 // pred_fallthru
        _
    $region6: #{tpu_custom_call.1} parent=1 // loop_footer
      %s27 = sadd.s32 1, %s23
    $region7: #{tpu_custom_call.1} parent=1 // loop_footer_branch
      %22 = sbr.rel target = $region3
    $region8: #{tpu_custom_call.1} parent=1 // loop_exit
      _
    %2007 = vsyncpa [#allocation3], 1
    %s2008 = scalar_lea.sflag [#allocation3], 1
    %2009 = vsyncpa %s2008, 1
    %2010 = vsyncpa [#allocation6], 1
    %2011 = vsyncpa [#allocation9], 1
    %2012 = vsyncpa [#allocation4], 1
    %s2013 = scalar_lea.sflag [#allocation4], 1
    %2014 = vsyncpa %s2013, 1

</llo_original>
